<compile_context>
chip_gen: v7x
topology: tpu7x:2x2x1
jax: 0.10.0
libtpu: 0.0.40
codegen_flags: <defaults>
</compile_context>

<pallas_src>
import functools

import jax
import jax.numpy as jnp
from jax.experimental import pallas as pl
from jax.experimental.pallas import tpu as pltpu


def _elu(x):
    # TODO(synk): jnp.expm1-based ELU matches jax.nn.elu slightly better near 0-;
    # exp(min(x,0))-1 kept because its Mosaic lowering is guaranteed.
    return jnp.where(x > 0, x, jnp.exp(jnp.minimum(x, 0.0)) - 1.0)


def _encoder_tile_kernel(xi_ref, xr_ref,
                         w1a_ref, b1a_ref, w1b_ref, b1b_ref,
                         w2a_ref, b2a_ref, w2b_ref, b2b_ref,
                         wla_ref, wlb_ref, bl_ref,
                         y_ref, stats_ref, *, kernel_size):
    """One batch-tile of all three encoder branches (un-normalized).

    Group A = branch 1 (systematic / interleaved input), width H.
    Group B = branches 2 & 3 fused along the lane axis, width 2H.

    xi_ref : (Bt, L, Cin) interleaved bits in {0,1}
    xr_ref : (Bt, L, Cin) raw bits in {0,1}
    w1a_ref: (K, Cin, H)     b1a_ref: (1, H)
    w1b_ref: (K, Cin, 2H)    b1b_ref: (1, 2H)
    w2a_ref: (K, H, H)       b2a_ref: (1, H)
    w2b_ref: (K, 2H, 2H)     b2b_ref: (1, 2H)    (block-diagonal per tap)
    wla_ref: (H, 3)  wlb_ref: (2H, 3)  bl_ref: (1, 3)
    y_ref  : (3, Bt*L)       lane-dense un-normalized codeword slab
    stats_ref: (8, 128)      [0,0]=sum(y), [0,1]=sum(y*y) for this tile
    """
    Bt, L, Cin = xi_ref.shape
    H = w1a_ref.shape[2]
    H2 = w1b_ref.shape[2]
    K = kernel_size
    pad = K // 2
    Lp = L + 2 * pad
    rows = Bt * L

    def pad_seq(x):
        z = jnp.zeros((Bt, pad, x.shape[2]), dtype=x.dtype)
        return jnp.concatenate([z, x, z], axis=1)            # (Bt, Lp, c)

    def conv1(x_pad, w1_ref, b1_ref, width):
        # x_pad: (Bt, Lp, Cin) in +/-1.  One lane-broadcast per input channel,
        # hoisted out of the tap loop; per-tap is a plain VPU FMA.
        h = jnp.zeros((Bt, L, width), jnp.float32) + b1_ref[...].astype(jnp.float32)
        for c in range(Cin):
            xc = jnp.broadcast_to(x_pad[:, :, c:c + 1], (Bt, Lp, width))
            for k in range(K):
                # TODO(synk): tap windows at offsets 1..K-1 still pay a sublane
                # relayout; a zero-padded VMEM scratch + pltpu.roll would move
                # the shift onto the idle XLU slot.
                h = h + xc[:, k:k + L, :] * w1_ref[k, c:c + 1, :].astype(jnp.float32)
        return _elu(h)

    def conv2(h, w2_ref, b2_ref, width):
        # K accumulated MXU matmuls instead of an im2col (rows, K*width) slab.
        hp = pad_seq(h)                                       # (Bt, Lp, width)
        acc = jnp.zeros((rows, width), jnp.float32)
        for k in range(K):
            lhs = hp[:, k:k + L, :].reshape(rows, width)
            # TODO(synk): cast lhs / w2 to bf16 at the dot boundary on v6e/v7x
            # at production shapes (kept f32 here for exact parity with ref).
            acc = acc + jnp.dot(lhs, w2_ref[k].astype(jnp.float32),
                                preferred_element_type=jnp.float32)
        return _elu(acc + b2_ref[...].astype(jnp.float32))

    xi = 2.0 * xi_ref[...].astype(jnp.float32) - 1.0         # 2u - 1
    xr = 2.0 * xr_ref[...].astype(jnp.float32) - 1.0

    # Group A: branch 1 on the interleaved bits.
    h1 = conv1(pad_seq(xi), w1a_ref, b1a_ref, H)
    h2a = conv2(h1, w2a_ref, b2a_ref, H)                      # (rows, H)

    # Group B: branches 2 & 3 fused (same raw-bit input).
    h23 = conv1(pad_seq(xr), w1b_ref, b1b_ref, H2)
    h2b = conv2(h23, w2b_ref, b2b_ref, H2)                    # (rows, 2H)

    # Three Linear(H, 1) heads as two zero-padded (., 3) matmuls (no concat).
    y = (jnp.dot(h2a, wla_ref[...].astype(jnp.float32),
                 preferred_element_type=jnp.float32)
         + jnp.dot(h2b, wlb_ref[...].astype(jnp.float32),
                   preferred_element_type=jnp.float32)
         + bl_ref[...].astype(jnp.float32))
    y = _elu(y)                                               # (rows, 3)

    # Lane-dense store: (3, rows).  Tiny transpose rides the idle XLU.
    y_ref[...] = y.T.astype(y_ref.dtype)

    # Per-tile partial sums for the global power constraint (finalized outside).
    s = jnp.sum(y)
    ss = jnp.sum(y * y)
    sub = jax.lax.broadcasted_iota(jnp.int32, (8, 128), 0)
    lane = jax.lax.broadcasted_iota(jnp.int32, (8, 128), 1)
    blk = jnp.where((sub == 0) & (lane == 0), s, 0.0)
    blk = jnp.where((sub == 0) & (lane == 1), ss, blk)
    stats_ref[...] = blk.astype(stats_ref.dtype)


def _normalize_kernel(stats_ref, y_ref, o_ref):
    """(y - mean) * inv_std over a lane-dense (3, rows) tile."""
    mean = stats_ref[0]
    inv_std = stats_ref[1]
    o_ref[...] = ((y_ref[...] - mean) * inv_std).astype(o_ref.dtype)


def _choose_batch_tile(batch, seq_len, target_rows=2048):
    """Largest legal batch tile near `target_rows` rows.

    Tile must divide the batch and produce a lane-legal output block:
    either the full batch, or Bt*L a multiple of 128 (lane-dense out_spec).
    ~2k rows keeps all per-tile activations well under VMEM on v5e/v6e/v7x.
    """
    divisors = [d for d in range(1, batch + 1) if batch % d == 0]
    valid = [d for d in divisors if d == batch or (d * seq_len) % 128 == 0]
    for d in valid:
        if d * seq_len >= target_rows:
            return d
    return batch


def enc_intercnn_forward(inputs, perm, params, *, batch_tile=None):
    """ENC_interCNN_modified.forward.  inputs: (B, L, k) bits in {0,1}."""
    B, L, Cin = inputs.shape
    K, _, H = params['w1_1'].shape
    H2 = 2 * H

    if batch_tile is None:
        batch_tile = _choose_batch_tile(B, L)
    assert B % batch_tile == 0
    num_tiles = B // batch_tile
    rows_tile = batch_tile * L
    rows = B * L

    f32 = jnp.float32
    inputs = inputs.astype(f32)
    # Interleaver: fixed permutation gather along L (glue, plain JAX; commutes
    # with the 2u-1 affine which lives inside the kernel).
    # TODO(synk): gather in-kernel via PrefetchScalarGridSpec (and pass bits as
    # int8) once input DMA shows up in a production profile.
    x_int = inputs[:, perm, :]

    # ---- fold the three branches into two lane groups (A = sys, B = p1|p2) ----
    w1a = params['w1_1'].astype(f32)                                        # (K,Cin,H)
    b1a = params['b1_1'].reshape(1, H).astype(f32)
    w1b = jnp.concatenate([params['w1_2'], params['w1_3']], axis=2).astype(f32)
    b1b = jnp.concatenate([params['b1_2'].reshape(1, H),
                           params['b1_3'].reshape(1, H)], axis=1).astype(f32)
    w2a = params['w2_1'].astype(f32)                                        # (K,H,H)
    b2a = params['b2_1'].reshape(1, H).astype(f32)
    w2b = jnp.zeros((K, H2, H2), f32)
    w2b = w2b.at[:, :H, :H].set(params['w2_2'].astype(f32))
    w2b = w2b.at[:, H:, H:].set(params['w2_3'].astype(f32))
    b2b = jnp.concatenate([params['b2_2'].reshape(1, H),
                           params['b2_3'].reshape(1, H)], axis=1).astype(f32)
    wla = jnp.zeros((H, 3), f32).at[:, 0].set(params['wl_1'].reshape(H).astype(f32))
    wlb = jnp.zeros((H2, 3), f32)
    wlb = wlb.at[:H, 1].set(params['wl_2'].reshape(H).astype(f32))
    wlb = wlb.at[H:, 2].set(params['wl_3'].reshape(H).astype(f32))
    bl = jnp.concatenate([params[f'bl_{i}'].reshape(1, 1) for i in (1, 2, 3)],
                         axis=1).astype(f32)                                # (1,3)

    def const_map(ndim):
        return lambda i: (0,) * ndim

    kern = functools.partial(_encoder_tile_kernel, kernel_size=K)
    y_lane, stats_part = pl.pallas_call(
        kern,
        out_shape=(jax.ShapeDtypeStruct((3, rows), f32),
                   jax.ShapeDtypeStruct((num_tiles * 8, 128), f32)),
        grid=(num_tiles,),
        in_specs=[
            pl.BlockSpec((batch_tile, L, Cin), lambda i: (i, 0, 0)),   # x_int
            pl.BlockSpec((batch_tile, L, Cin), lambda i: (i, 0, 0)),   # x_raw
            pl.BlockSpec(w1a.shape, const_map(3)),
            pl.BlockSpec(b1a.shape, const_map(2)),
            pl.BlockSpec(w1b.shape, const_map(3)),
            pl.BlockSpec(b1b.shape, const_map(2)),
            pl.BlockSpec(w2a.shape, const_map(3)),
            pl.BlockSpec(b2a.shape, const_map(2)),
            pl.BlockSpec(w2b.shape, const_map(3)),
            pl.BlockSpec(b2b.shape, const_map(2)),
            pl.BlockSpec(wla.shape, const_map(2)),
            pl.BlockSpec(wlb.shape, const_map(2)),
            pl.BlockSpec(bl.shape, const_map(2)),
        ],
        out_specs=(
            pl.BlockSpec((3, rows_tile), lambda i: (0, i)),            # lane-dense
            pl.BlockSpec((8, 128), lambda i: (i, 0)),                  # partial sums
        ),
        compiler_params=pltpu.CompilerParams(
            dimension_semantics=("parallel",),
            vmem_limit_bytes=32 * 1024 * 1024),
    )(x_int, inputs, w1a, b1a, w1b, b1b, w2a, b2a, w2b, b2b, wla, wlb, bl)

    # ---- finalize global power constraint: mean / (unbiased) std ----
    parts = stats_part.reshape(num_tiles, 8, 128)
    total = jnp.sum(parts[:, 0, 0])
    total_sq = jnp.sum(parts[:, 0, 1])
    n = rows * 3
    mean = total / n
    var = (total_sq - n * mean * mean) / max(n - 1, 1)       # Bessel-corrected
    inv_std = jax.lax.rsqrt(var)
    stats = jnp.stack([mean, inv_std]).astype(f32)           # (2,) scalars -> SMEM

    codes_lane = pl.pallas_call(
        _normalize_kernel,
        out_shape=jax.ShapeDtypeStruct((3, rows), f32),
        grid=(num_tiles,),
        in_specs=[
            pl.BlockSpec(memory_space=pltpu.MemorySpace.SMEM),
            pl.BlockSpec((3, rows_tile), lambda i: (0, i)),
        ],
        out_specs=pl.BlockSpec((3, rows_tile), lambda i: (0, i)),
        compiler_params=pltpu.CompilerParams(
            dimension_semantics=("parallel",)),
    )(stats, y_lane)

    # TODO(synk): STEQuantize path (train_channel_mode='block_norm_ste') not modeled.
    return codes_lane.T.reshape(B, L, 3)


# ----------------------- pure-JAX reference for checking -----------------------
def _ref_forward(inputs, perm, p):
    x = 2.0 * inputs - 1.0
    x_int = x[:, perm, :]

    def conv(xi, w, b):
        K = w.shape[0]
        pad = K // 2
        L = xi.shape[1]
        xp = jnp.pad(xi, ((0, 0), (pad, pad), (0, 0)))
        acc = jnp.zeros((xi.shape[0], L, w.shape[2])) + b.reshape(1, 1, -1)
        for k in range(K):
            acc = acc + jnp.einsum('blc,ch->blh', xp[:, k:k + L, :], w[k])
        return acc

    def branch(xi, i):
        h = jax.nn.elu(conv(xi, p[f'w1_{i}'], p[f'b1_{i}']))
        h = jax.nn.elu(conv(h, p[f'w2_{i}'], p[f'b2_{i}']))
        y = jnp.einsum('blh,h->bl', h, p[f'wl_{i}'].reshape(-1))[..., None]
        return jax.nn.elu(y + p[f'bl_{i}'].reshape(1, 1, 1))

    x_tx = jnp.concatenate([branch(x_int, 1), branch(x, 2), branch(x, 3)], axis=2)
    m = jnp.mean(x_tx)
    s = jnp.sqrt(jnp.sum((x_tx - m) ** 2) / (x_tx.size - 1))
    return (x_tx - m) / s


def _init_params(key, k_in, H, K):
    params = {}
    for i in (1, 2, 3):
        key, *ks = jax.random.split(key, 7)
        params[f'w1_{i}'] = 0.2 * jax.random.normal(ks[0], (K, k_in, H), jnp.float32)
        params[f'b1_{i}'] = 0.1 * jax.random.normal(ks[1], (1, H), jnp.float32)
        params[f'w2_{i}'] = 0.2 * jax.random.normal(ks[2], (K, H, H), jnp.float32)
        params[f'b2_{i}'] = 0.1 * jax.random.normal(ks[3], (1, H), jnp.float32)
        params[f'wl_{i}'] = 0.2 * jax.random.normal(ks[4], (1, H), jnp.float32)
        params[f'bl_{i}'] = 0.1 * jax.random.normal(ks[5], (1, 1), jnp.float32)
    return params


if __name__ == "__main__":
    # args: code_rate_k=1, enc_num_unit=32, enc_kernel_size=5, enc_num_layer=2,
    #       enc_act='elu', block_len=16, batch=2
    B, L, K_IN, H, KSZ = 2, 16, 1, 32, 5

    key = jax.random.PRNGKey(0)
    k_in, k_perm, k_par = jax.random.split(key, 3)

    inputs = jax.random.bernoulli(k_in, 0.5, (B, L, K_IN)).astype(jnp.float32)
    perm = jax.random.permutation(k_perm, L)          # interleaver permutation
    params = _init_params(k_par, K_IN, H, KSZ)

    codes = enc_intercnn_forward(inputs, perm, params)
    codes = jax.block_until_ready(codes)

    ref = _ref_forward(inputs, perm, params)
    if not jnp.allclose(codes, ref, atol=2e-4, rtol=2e-4):
        raise AssertionError("Pallas output mismatch vs pure-JAX reference")

    print("KERNEL_OK")
</pallas_src>

<mosaic_0001>
module attributes {stable_mosaic.version = 11 : i64} {
  func.func @_encoder_tile_kernel(%arg0: i32, %arg1: memref<2x16x1xf32, #tpu.memory_space<vmem>>, %arg2: memref<2x16x1xf32, #tpu.memory_space<vmem>>, %arg3: memref<5x1x32xf32, #tpu.memory_space<vmem>>, %arg4: memref<1x32xf32, #tpu.memory_space<vmem>>, %arg5: memref<5x1x64xf32, #tpu.memory_space<vmem>>, %arg6: memref<1x64xf32, #tpu.memory_space<vmem>>, %arg7: memref<5x32x32xf32, #tpu.memory_space<vmem>>, %arg8: memref<1x32xf32, #tpu.memory_space<vmem>>, %arg9: memref<5x64x64xf32, #tpu.memory_space<vmem>>, %arg10: memref<1x64xf32, #tpu.memory_space<vmem>>, %arg11: memref<32x3xf32, #tpu.memory_space<vmem>>, %arg12: memref<64x3xf32, #tpu.memory_space<vmem>>, %arg13: memref<1x3xf32, #tpu.memory_space<vmem>>, %arg14: memref<3x32xf32, #tpu.memory_space<vmem>>, %arg15: memref<8x128xf32, #tpu.memory_space<vmem>>) attributes {dimension_semantics = [#tpu.dimension_semantics<parallel>], iteration_bounds = array<i64: 1>, scalar_prefetch = 0 : i64, scratch_operands = 0 : i64, tpu.core_type = #tpu.core_type<tc>, window_params = [{transform_indices = @transform_0, window_bounds = array<i64: 2, 16, 1>}, {transform_indices = @transform_1, window_bounds = array<i64: 2, 16, 1>}, {pipeline_mode = #tpu.pipeline_mode<synchronous>, transform_indices = @transform_2, window_bounds = array<i64: 5, 1, 32>}, {pipeline_mode = #tpu.pipeline_mode<synchronous>, transform_indices = @transform_3, window_bounds = array<i64: 1, 32>}, {pipeline_mode = #tpu.pipeline_mode<synchronous>, transform_indices = @transform_4, window_bounds = array<i64: 5, 1, 64>}, {pipeline_mode = #tpu.pipeline_mode<synchronous>, transform_indices = @transform_5, window_bounds = array<i64: 1, 64>}, {pipeline_mode = #tpu.pipeline_mode<synchronous>, transform_indices = @transform_6, window_bounds = array<i64: 5, 32, 32>}, {pipeline_mode = #tpu.pipeline_mode<synchronous>, transform_indices = @transform_7, window_bounds = array<i64: 1, 32>}, {pipeline_mode = #tpu.pipeline_mode<synchronous>, transform_indices = @transform_8, window_bounds = array<i64: 5, 64, 64>}, {pipeline_mode = #tpu.pipeline_mode<synchronous>, transform_indices = @transform_9, window_bounds = array<i64: 1, 64>}, {pipeline_mode = #tpu.pipeline_mode<synchronous>, transform_indices = @transform_10, window_bounds = array<i64: 32, 3>}, {pipeline_mode = #tpu.pipeline_mode<synchronous>, transform_indices = @transform_11, window_bounds = array<i64: 64, 3>}, {pipeline_mode = #tpu.pipeline_mode<synchronous>, transform_indices = @transform_12, window_bounds = array<i64: 1, 3>}, {transform_indices = @transform_13, window_bounds = array<i64: 3, 32>}, {transform_indices = @transform_14, window_bounds = array<i64: 8, 128>}]} {
    %c0 = arith.constant 0 : index
    %c0_0 = arith.constant 0 : index
    %c0_1 = arith.constant 0 : index
    %0 = vector.load %arg1[%c0, %c0_0, %c0_1] : memref<2x16x1xf32, #tpu.memory_space<vmem>>, vector<2x16x1xf32>
    %cst = arith.constant 2.000000e+00 : f32
    %1 = vector.broadcast %cst : f32 to vector<2x16x1xf32>
    %2 = arith.mulf %1, %0 : vector<2x16x1xf32>
    %cst_2 = arith.constant 1.000000e+00 : f32
    %3 = vector.broadcast %cst_2 : f32 to vector<2x16x1xf32>
    %4 = arith.subf %2, %3 : vector<2x16x1xf32>
    %c0_3 = arith.constant 0 : index
    %c0_4 = arith.constant 0 : index
    %c0_5 = arith.constant 0 : index
    %5 = vector.load %arg2[%c0_3, %c0_4, %c0_5] : memref<2x16x1xf32, #tpu.memory_space<vmem>>, vector<2x16x1xf32>
    %cst_6 = arith.constant 2.000000e+00 : f32
    %6 = vector.broadcast %cst_6 : f32 to vector<2x16x1xf32>
    %7 = arith.mulf %6, %5 : vector<2x16x1xf32>
    %cst_7 = arith.constant 1.000000e+00 : f32
    %8 = vector.broadcast %cst_7 : f32 to vector<2x16x1xf32>
    %9 = arith.subf %7, %8 : vector<2x16x1xf32>
    %cst_8 = arith.constant 0.000000e+00 : f32
    %10 = vector.broadcast %cst_8 : f32 to vector<2x2x1xf32>
    %11 = tpu.concatenate %10, %4, %10 in 1 : vector<2x2x1xf32>, vector<2x16x1xf32>, vector<2x2x1xf32> -> vector<2x20x1xf32>
    %cst_9 = arith.constant 0.000000e+00 : f32
    %12 = vector.broadcast %cst_9 : f32 to vector<2x16x32xf32>
    %c0_10 = arith.constant 0 : index
    %c0_11 = arith.constant 0 : index
    %13 = vector.load %arg4[%c0_10, %c0_11] : memref<1x32xf32, #tpu.memory_space<vmem>>, vector<1x32xf32>
    %14 = vector.shape_cast %13 : vector<1x32xf32> to vector<1x1x32xf32>
    %15 = vector.broadcast %14 : vector<1x1x32xf32> to vector<2x16x32xf32>
    %16 = arith.addf %12, %15 : vector<2x16x32xf32>
    %17 = vector.shape_cast %11 : vector<2x20x1xf32> to vector<2x20x1xf32>
    %18 = vector.broadcast %17 : vector<2x20x1xf32> to vector<2x20x32xf32>
    %19 = vector.extract_strided_slice %18 {offsets = [0, 0, 0], sizes = [2, 16, 32], strides = [1, 1, 1]} : vector<2x20x32xf32> to vector<2x16x32xf32>
    %c0_12 = arith.constant 0 : index
    %c0_13 = arith.constant 0 : index
    %c0_14 = arith.constant 0 : index
    %20 = vector.load %arg3[%c0_12, %c0_13, %c0_14] : memref<5x1x32xf32, #tpu.memory_space<vmem>>, vector<1x1x32xf32>
    %21 = vector.shape_cast %20 : vector<1x1x32xf32> to vector<1x32xf32>
    %22 = vector.shape_cast %21 : vector<1x32xf32> to vector<1x1x32xf32>
    %23 = vector.broadcast %22 : vector<1x1x32xf32> to vector<2x16x32xf32>
    %24 = arith.mulf %19, %23 : vector<2x16x32xf32>
    %25 = arith.addf %16, %24 : vector<2x16x32xf32>
    %26 = vector.extract_strided_slice %18 {offsets = [0, 1, 0], sizes = [2, 16, 32], strides = [1, 1, 1]} : vector<2x20x32xf32> to vector<2x16x32xf32>
    %c1 = arith.constant 1 : index
    %c0_15 = arith.constant 0 : index
    %c0_16 = arith.constant 0 : index
    %27 = vector.load %arg3[%c1, %c0_15, %c0_16] : memref<5x1x32xf32, #tpu.memory_space<vmem>>, vector<1x1x32xf32>
    %28 = vector.shape_cast %27 : vector<1x1x32xf32> to vector<1x32xf32>
    %29 = vector.shape_cast %28 : vector<1x32xf32> to vector<1x1x32xf32>
    %30 = vector.broadcast %29 : vector<1x1x32xf32> to vector<2x16x32xf32>
    %31 = arith.mulf %26, %30 : vector<2x16x32xf32>
    %32 = arith.addf %25, %31 : vector<2x16x32xf32>
    %33 = vector.extract_strided_slice %18 {offsets = [0, 2, 0], sizes = [2, 16, 32], strides = [1, 1, 1]} : vector<2x20x32xf32> to vector<2x16x32xf32>
    %c2 = arith.constant 2 : index
    %c0_17 = arith.constant 0 : index
    %c0_18 = arith.constant 0 : index
    %34 = vector.load %arg3[%c2, %c0_17, %c0_18] : memref<5x1x32xf32, #tpu.memory_space<vmem>>, vector<1x1x32xf32>
    %35 = vector.shape_cast %34 : vector<1x1x32xf32> to vector<1x32xf32>
    %36 = vector.shape_cast %35 : vector<1x32xf32> to vector<1x1x32xf32>
    %37 = vector.broadcast %36 : vector<1x1x32xf32> to vector<2x16x32xf32>
    %38 = arith.mulf %33, %37 : vector<2x16x32xf32>
    %39 = arith.addf %32, %38 : vector<2x16x32xf32>
    %40 = vector.extract_strided_slice %18 {offsets = [0, 3, 0], sizes = [2, 16, 32], strides = [1, 1, 1]} : vector<2x20x32xf32> to vector<2x16x32xf32>
    %c3 = arith.constant 3 : index
    %c0_19 = arith.constant 0 : index
    %c0_20 = arith.constant 0 : index
    %41 = vector.load %arg3[%c3, %c0_19, %c0_20] : memref<5x1x32xf32, #tpu.memory_space<vmem>>, vector<1x1x32xf32>
    %42 = vector.shape_cast %41 : vector<1x1x32xf32> to vector<1x32xf32>
    %43 = vector.shape_cast %42 : vector<1x32xf32> to vector<1x1x32xf32>
    %44 = vector.broadcast %43 : vector<1x1x32xf32> to vector<2x16x32xf32>
    %45 = arith.mulf %40, %44 : vector<2x16x32xf32>
    %46 = arith.addf %39, %45 : vector<2x16x32xf32>
    %47 = vector.extract_strided_slice %18 {offsets = [0, 4, 0], sizes = [2, 16, 32], strides = [1, 1, 1]} : vector<2x20x32xf32> to vector<2x16x32xf32>
    %c4 = arith.constant 4 : index
    %c0_21 = arith.constant 0 : index
    %c0_22 = arith.constant 0 : index
    %48 = vector.load %arg3[%c4, %c0_21, %c0_22] : memref<5x1x32xf32, #tpu.memory_space<vmem>>, vector<1x1x32xf32>
    %49 = vector.shape_cast %48 : vector<1x1x32xf32> to vector<1x32xf32>
    %50 = vector.shape_cast %49 : vector<1x32xf32> to vector<1x1x32xf32>
    %51 = vector.broadcast %50 : vector<1x1x32xf32> to vector<2x16x32xf32>
    %52 = arith.mulf %47, %51 : vector<2x16x32xf32>
    %53 = arith.addf %46, %52 : vector<2x16x32xf32>
    %cst_23 = arith.constant 0.000000e+00 : f32
    %54 = vector.broadcast %cst_23 : f32 to vector<2x16x32xf32>
    %55 = arith.cmpf ogt, %53, %54 : vector<2x16x32xf32>
    %cst_24 = arith.constant 0.000000e+00 : f32
    %56 = vector.broadcast %cst_24 : f32 to vector<2x16x32xf32>
    %57 = arith.minimumf %53, %56 : vector<2x16x32xf32>
    %58 = math.exp %57 : vector<2x16x32xf32>
    %cst_25 = arith.constant 1.000000e+00 : f32
    %59 = vector.broadcast %cst_25 : f32 to vector<2x16x32xf32>
    %60 = arith.subf %58, %59 : vector<2x16x32xf32>
    %61 = arith.select %55, %53, %60 : vector<2x16x32xi1>, vector<2x16x32xf32>
    %cst_26 = arith.constant 0.000000e+00 : f32
    %62 = vector.broadcast %cst_26 : f32 to vector<2x2x32xf32>
    %63 = tpu.concatenate %62, %61, %62 in 1 : vector<2x2x32xf32>, vector<2x16x32xf32>, vector<2x2x32xf32> -> vector<2x20x32xf32>
    %cst_27 = arith.constant 0.000000e+00 : f32
    %64 = vector.broadcast %cst_27 : f32 to vector<32x32xf32>
    %65 = vector.extract_strided_slice %63 {offsets = [0, 0, 0], sizes = [2, 16, 32], strides = [1, 1, 1]} : vector<2x20x32xf32> to vector<2x16x32xf32>
    %66 = vector.shape_cast %65 : vector<2x16x32xf32> to vector<32x32xf32>
    %c0_28 = arith.constant 0 : index
    %c0_29 = arith.constant 0 : index
    %c0_30 = arith.constant 0 : index
    %67 = vector.load %arg7[%c0_28, %c0_29, %c0_30] : memref<5x32x32xf32, #tpu.memory_space<vmem>>, vector<1x32x32xf32>
    %68 = vector.shape_cast %67 : vector<1x32x32xf32> to vector<32x32xf32>
    %cst_31 = arith.constant dense<0.000000e+00> : vector<32x32xf32>
    %69 = tpu.matmul %66, %68, %cst_31 {dimension_numbers = #tpu.dot_dimension_numbers<[1], [0], [0], [1], [0, 0, 1, 1], [], []>} : vector<32x32xf32>, vector<32x32xf32>, vector<32x32xf32> -> vector<32x32xf32>
    %70 = arith.addf %64, %69 : vector<32x32xf32>
    %71 = vector.extract_strided_slice %63 {offsets = [0, 1, 0], sizes = [2, 16, 32], strides = [1, 1, 1]} : vector<2x20x32xf32> to vector<2x16x32xf32>
    %72 = vector.shape_cast %71 : vector<2x16x32xf32> to vector<32x32xf32>
    %c1_32 = arith.constant 1 : index
    %c0_33 = arith.constant 0 : index
    %c0_34 = arith.constant 0 : index
    %73 = vector.load %arg7[%c1_32, %c0_33, %c0_34] : memref<5x32x32xf32, #tpu.memory_space<vmem>>, vector<1x32x32xf32>
    %74 = vector.shape_cast %73 : vector<1x32x32xf32> to vector<32x32xf32>
    %cst_35 = arith.constant dense<0.000000e+00> : vector<32x32xf32>
    %75 = tpu.matmul %72, %74, %cst_35 {dimension_numbers = #tpu.dot_dimension_numbers<[1], [0], [0], [1], [0, 0, 1, 1], [], []>} : vector<32x32xf32>, vector<32x32xf32>, vector<32x32xf32> -> vector<32x32xf32>
    %76 = arith.addf %70, %75 : vector<32x32xf32>
    %77 = vector.extract_strided_slice %63 {offsets = [0, 2, 0], sizes = [2, 16, 32], strides = [1, 1, 1]} : vector<2x20x32xf32> to vector<2x16x32xf32>
    %78 = vector.shape_cast %77 : vector<2x16x32xf32> to vector<32x32xf32>
    %c2_36 = arith.constant 2 : index
    %c0_37 = arith.constant 0 : index
    %c0_38 = arith.constant 0 : index
    %79 = vector.load %arg7[%c2_36, %c0_37, %c0_38] : memref<5x32x32xf32, #tpu.memory_space<vmem>>, vector<1x32x32xf32>
    %80 = vector.shape_cast %79 : vector<1x32x32xf32> to vector<32x32xf32>
    %cst_39 = arith.constant dense<0.000000e+00> : vector<32x32xf32>
    %81 = tpu.matmul %78, %80, %cst_39 {dimension_numbers = #tpu.dot_dimension_numbers<[1], [0], [0], [1], [0, 0, 1, 1], [], []>} : vector<32x32xf32>, vector<32x32xf32>, vector<32x32xf32> -> vector<32x32xf32>
    %82 = arith.addf %76, %81 : vector<32x32xf32>
    %83 = vector.extract_strided_slice %63 {offsets = [0, 3, 0], sizes = [2, 16, 32], strides = [1, 1, 1]} : vector<2x20x32xf32> to vector<2x16x32xf32>
    %84 = vector.shape_cast %83 : vector<2x16x32xf32> to vector<32x32xf32>
    %c3_40 = arith.constant 3 : index
    %c0_41 = arith.constant 0 : index
    %c0_42 = arith.constant 0 : index
    %85 = vector.load %arg7[%c3_40, %c0_41, %c0_42] : memref<5x32x32xf32, #tpu.memory_space<vmem>>, vector<1x32x32xf32>
    %86 = vector.shape_cast %85 : vector<1x32x32xf32> to vector<32x32xf32>
    %cst_43 = arith.constant dense<0.000000e+00> : vector<32x32xf32>
    %87 = tpu.matmul %84, %86, %cst_43 {dimension_numbers = #tpu.dot_dimension_numbers<[1], [0], [0], [1], [0, 0, 1, 1], [], []>} : vector<32x32xf32>, vector<32x32xf32>, vector<32x32xf32> -> vector<32x32xf32>
    %88 = arith.addf %82, %87 : vector<32x32xf32>
    %89 = vector.extract_strided_slice %63 {offsets = [0, 4, 0], sizes = [2, 16, 32], strides = [1, 1, 1]} : vector<2x20x32xf32> to vector<2x16x32xf32>
    %90 = vector.shape_cast %89 : vector<2x16x32xf32> to vector<32x32xf32>
    %c4_44 = arith.constant 4 : index
    %c0_45 = arith.constant 0 : index
    %c0_46 = arith.constant 0 : index
    %91 = vector.load %arg7[%c4_44, %c0_45, %c0_46] : memref<5x32x32xf32, #tpu.memory_space<vmem>>, vector<1x32x32xf32>
    %92 = vector.shape_cast %91 : vector<1x32x32xf32> to vector<32x32xf32>
    %cst_47 = arith.constant dense<0.000000e+00> : vector<32x32xf32>
    %93 = tpu.matmul %90, %92, %cst_47 {dimension_numbers = #tpu.dot_dimension_numbers<[1], [0], [0], [1], [0, 0, 1, 1], [], []>} : vector<32x32xf32>, vector<32x32xf32>, vector<32x32xf32> -> vector<32x32xf32>
    %94 = arith.addf %88, %93 : vector<32x32xf32>
    %c0_48 = arith.constant 0 : index
    %c0_49 = arith.constant 0 : index
    %95 = vector.load %arg8[%c0_48, %c0_49] : memref<1x32xf32, #tpu.memory_space<vmem>>, vector<1x32xf32>
    %96 = vector.broadcast %95 : vector<1x32xf32> to vector<32x32xf32>
    %97 = arith.addf %94, %96 : vector<32x32xf32>
    %cst_50 = arith.constant 0.000000e+00 : f32
    %98 = vector.broadcast %cst_50 : f32 to vector<32x32xf32>
    %99 = arith.cmpf ogt, %97, %98 : vector<32x32xf32>
    %cst_51 = arith.constant 0.000000e+00 : f32
    %100 = vector.broadcast %cst_51 : f32 to vector<32x32xf32>
    %101 = arith.minimumf %97, %100 : vector<32x32xf32>
    %102 = math.exp %101 : vector<32x32xf32>
    %cst_52 = arith.constant 1.000000e+00 : f32
    %103 = vector.broadcast %cst_52 : f32 to vector<32x32xf32>
    %104 = arith.subf %102, %103 : vector<32x32xf32>
    %105 = arith.select %99, %97, %104 : vector<32x32xi1>, vector<32x32xf32>
    %cst_53 = arith.constant 0.000000e+00 : f32
    %106 = vector.broadcast %cst_53 : f32 to vector<2x2x1xf32>
    %107 = tpu.concatenate %106, %9, %106 in 1 : vector<2x2x1xf32>, vector<2x16x1xf32>, vector<2x2x1xf32> -> vector<2x20x1xf32>
    %cst_54 = arith.constant 0.000000e+00 : f32
    %108 = vector.broadcast %cst_54 : f32 to vector<2x16x64xf32>
    %c0_55 = arith.constant 0 : index
    %c0_56 = arith.constant 0 : index
    %109 = vector.load %arg6[%c0_55, %c0_56] : memref<1x64xf32, #tpu.memory_space<vmem>>, vector<1x64xf32>
    %110 = vector.shape_cast %109 : vector<1x64xf32> to vector<1x1x64xf32>
    %111 = vector.broadcast %110 : vector<1x1x64xf32> to vector<2x16x64xf32>
    %112 = arith.addf %108, %111 : vector<2x16x64xf32>
    %113 = vector.shape_cast %107 : vector<2x20x1xf32> to vector<2x20x1xf32>
    %114 = vector.broadcast %113 : vector<2x20x1xf32> to vector<2x20x64xf32>
    %115 = vector.extract_strided_slice %114 {offsets = [0, 0, 0], sizes = [2, 16, 64], strides = [1, 1, 1]} : vector<2x20x64xf32> to vector<2x16x64xf32>
    %c0_57 = arith.constant 0 : index
    %c0_58 = arith.constant 0 : index
    %c0_59 = arith.constant 0 : index
    %116 = vector.load %arg5[%c0_57, %c0_58, %c0_59] : memref<5x1x64xf32, #tpu.memory_space<vmem>>, vector<1x1x64xf32>
    %117 = vector.shape_cast %116 : vector<1x1x64xf32> to vector<1x64xf32>
    %118 = vector.shape_cast %117 : vector<1x64xf32> to vector<1x1x64xf32>
    %119 = vector.broadcast %118 : vector<1x1x64xf32> to vector<2x16x64xf32>
    %120 = arith.mulf %115, %119 : vector<2x16x64xf32>
    %121 = arith.addf %112, %120 : vector<2x16x64xf32>
    %122 = vector.extract_strided_slice %114 {offsets = [0, 1, 0], sizes = [2, 16, 64], strides = [1, 1, 1]} : vector<2x20x64xf32> to vector<2x16x64xf32>
    %c1_60 = arith.constant 1 : index
    %c0_61 = arith.constant 0 : index
    %c0_62 = arith.constant 0 : index
    %123 = vector.load %arg5[%c1_60, %c0_61, %c0_62] : memref<5x1x64xf32, #tpu.memory_space<vmem>>, vector<1x1x64xf32>
    %124 = vector.shape_cast %123 : vector<1x1x64xf32> to vector<1x64xf32>
    %125 = vector.shape_cast %124 : vector<1x64xf32> to vector<1x1x64xf32>
    %126 = vector.broadcast %125 : vector<1x1x64xf32> to vector<2x16x64xf32>
    %127 = arith.mulf %122, %126 : vector<2x16x64xf32>
    %128 = arith.addf %121, %127 : vector<2x16x64xf32>
    %129 = vector.extract_strided_slice %114 {offsets = [0, 2, 0], sizes = [2, 16, 64], strides = [1, 1, 1]} : vector<2x20x64xf32> to vector<2x16x64xf32>
    %c2_63 = arith.constant 2 : index
    %c0_64 = arith.constant 0 : index
    %c0_65 = arith.constant 0 : index
    %130 = vector.load %arg5[%c2_63, %c0_64, %c0_65] : memref<5x1x64xf32, #tpu.memory_space<vmem>>, vector<1x1x64xf32>
    %131 = vector.shape_cast %130 : vector<1x1x64xf32> to vector<1x64xf32>
    %132 = vector.shape_cast %131 : vector<1x64xf32> to vector<1x1x64xf32>
    %133 = vector.broadcast %132 : vector<1x1x64xf32> to vector<2x16x64xf32>
    %134 = arith.mulf %129, %133 : vector<2x16x64xf32>
    %135 = arith.addf %128, %134 : vector<2x16x64xf32>
    %136 = vector.extract_strided_slice %114 {offsets = [0, 3, 0], sizes = [2, 16, 64], strides = [1, 1, 1]} : vector<2x20x64xf32> to vector<2x16x64xf32>
    %c3_66 = arith.constant 3 : index
    %c0_67 = arith.constant 0 : index
    %c0_68 = arith.constant 0 : index
    %137 = vector.load %arg5[%c3_66, %c0_67, %c0_68] : memref<5x1x64xf32, #tpu.memory_space<vmem>>, vector<1x1x64xf32>
    %138 = vector.shape_cast %137 : vector<1x1x64xf32> to vector<1x64xf32>
    %139 = vector.shape_cast %138 : vector<1x64xf32> to vector<1x1x64xf32>
    %140 = vector.broadcast %139 : vector<1x1x64xf32> to vector<2x16x64xf32>
    %141 = arith.mulf %136, %140 : vector<2x16x64xf32>
    %142 = arith.addf %135, %141 : vector<2x16x64xf32>
    %143 = vector.extract_strided_slice %114 {offsets = [0, 4, 0], sizes = [2, 16, 64], strides = [1, 1, 1]} : vector<2x20x64xf32> to vector<2x16x64xf32>
    %c4_69 = arith.constant 4 : index
    %c0_70 = arith.constant 0 : index
    %c0_71 = arith.constant 0 : index
    %144 = vector.load %arg5[%c4_69, %c0_70, %c0_71] : memref<5x1x64xf32, #tpu.memory_space<vmem>>, vector<1x1x64xf32>
    %145 = vector.shape_cast %144 : vector<1x1x64xf32> to vector<1x64xf32>
    %146 = vector.shape_cast %145 : vector<1x64xf32> to vector<1x1x64xf32>
    %147 = vector.broadcast %146 : vector<1x1x64xf32> to vector<2x16x64xf32>
    %148 = arith.mulf %143, %147 : vector<2x16x64xf32>
    %149 = arith.addf %142, %148 : vector<2x16x64xf32>
    %cst_72 = arith.constant 0.000000e+00 : f32
    %150 = vector.broadcast %cst_72 : f32 to vector<2x16x64xf32>
    %151 = arith.cmpf ogt, %149, %150 : vector<2x16x64xf32>
    %cst_73 = arith.constant 0.000000e+00 : f32
    %152 = vector.broadcast %cst_73 : f32 to vector<2x16x64xf32>
    %153 = arith.minimumf %149, %152 : vector<2x16x64xf32>
    %154 = math.exp %153 : vector<2x16x64xf32>
    %cst_74 = arith.constant 1.000000e+00 : f32
    %155 = vector.broadcast %cst_74 : f32 to vector<2x16x64xf32>
    %156 = arith.subf %154, %155 : vector<2x16x64xf32>
    %157 = arith.select %151, %149, %156 : vector<2x16x64xi1>, vector<2x16x64xf32>
    %cst_75 = arith.constant 0.000000e+00 : f32
    %158 = vector.broadcast %cst_75 : f32 to vector<2x2x64xf32>
    %159 = tpu.concatenate %158, %157, %158 in 1 : vector<2x2x64xf32>, vector<2x16x64xf32>, vector<2x2x64xf32> -> vector<2x20x64xf32>
    %cst_76 = arith.constant 0.000000e+00 : f32
    %160 = vector.broadcast %cst_76 : f32 to vector<32x64xf32>
    %161 = vector.extract_strided_slice %159 {offsets = [0, 0, 0], sizes = [2, 16, 64], strides = [1, 1, 1]} : vector<2x20x64xf32> to vector<2x16x64xf32>
    %162 = vector.shape_cast %161 : vector<2x16x64xf32> to vector<32x64xf32>
    %c0_77 = arith.constant 0 : index
    %c0_78 = arith.constant 0 : index
    %c0_79 = arith.constant 0 : index
    %163 = vector.load %arg9[%c0_77, %c0_78, %c0_79] : memref<5x64x64xf32, #tpu.memory_space<vmem>>, vector<1x64x64xf32>
    %164 = vector.shape_cast %163 : vector<1x64x64xf32> to vector<64x64xf32>
    %cst_80 = arith.constant dense<0.000000e+00> : vector<32x64xf32>
    %165 = tpu.matmul %162, %164, %cst_80 {dimension_numbers = #tpu.dot_dimension_numbers<[1], [0], [0], [1], [0, 0, 1, 1], [], []>} : vector<32x64xf32>, vector<64x64xf32>, vector<32x64xf32> -> vector<32x64xf32>
    %166 = arith.addf %160, %165 : vector<32x64xf32>
    %167 = vector.extract_strided_slice %159 {offsets = [0, 1, 0], sizes = [2, 16, 64], strides = [1, 1, 1]} : vector<2x20x64xf32> to vector<2x16x64xf32>
    %168 = vector.shape_cast %167 : vector<2x16x64xf32> to vector<32x64xf32>
    %c1_81 = arith.constant 1 : index
    %c0_82 = arith.constant 0 : index
    %c0_83 = arith.constant 0 : index
    %169 = vector.load %arg9[%c1_81, %c0_82, %c0_83] : memref<5x64x64xf32, #tpu.memory_space<vmem>>, vector<1x64x64xf32>
    %170 = vector.shape_cast %169 : vector<1x64x64xf32> to vector<64x64xf32>
    %cst_84 = arith.constant dense<0.000000e+00> : vector<32x64xf32>
    %171 = tpu.matmul %168, %170, %cst_84 {dimension_numbers = #tpu.dot_dimension_numbers<[1], [0], [0], [1], [0, 0, 1, 1], [], []>} : vector<32x64xf32>, vector<64x64xf32>, vector<32x64xf32> -> vector<32x64xf32>
    %172 = arith.addf %166, %171 : vector<32x64xf32>
    %173 = vector.extract_strided_slice %159 {offsets = [0, 2, 0], sizes = [2, 16, 64], strides = [1, 1, 1]} : vector<2x20x64xf32> to vector<2x16x64xf32>
    %174 = vector.shape_cast %173 : vector<2x16x64xf32> to vector<32x64xf32>
    %c2_85 = arith.constant 2 : index
    %c0_86 = arith.constant 0 : index
    %c0_87 = arith.constant 0 : index
    %175 = vector.load %arg9[%c2_85, %c0_86, %c0_87] : memref<5x64x64xf32, #tpu.memory_space<vmem>>, vector<1x64x64xf32>
    %176 = vector.shape_cast %175 : vector<1x64x64xf32> to vector<64x64xf32>
    %cst_88 = arith.constant dense<0.000000e+00> : vector<32x64xf32>
    %177 = tpu.matmul %174, %176, %cst_88 {dimension_numbers = #tpu.dot_dimension_numbers<[1], [0], [0], [1], [0, 0, 1, 1], [], []>} : vector<32x64xf32>, vector<64x64xf32>, vector<32x64xf32> -> vector<32x64xf32>
    %178 = arith.addf %172, %177 : vector<32x64xf32>
    %179 = vector.extract_strided_slice %159 {offsets = [0, 3, 0], sizes = [2, 16, 64], strides = [1, 1, 1]} : vector<2x20x64xf32> to vector<2x16x64xf32>
    %180 = vector.shape_cast %179 : vector<2x16x64xf32> to vector<32x64xf32>
    %c3_89 = arith.constant 3 : index
    %c0_90 = arith.constant 0 : index
    %c0_91 = arith.constant 0 : index
    %181 = vector.load %arg9[%c3_89, %c0_90, %c0_91] : memref<5x64x64xf32, #tpu.memory_space<vmem>>, vector<1x64x64xf32>
    %182 = vector.shape_cast %181 : vector<1x64x64xf32> to vector<64x64xf32>
    %cst_92 = arith.constant dense<0.000000e+00> : vector<32x64xf32>
    %183 = tpu.matmul %180, %182, %cst_92 {dimension_numbers = #tpu.dot_dimension_numbers<[1], [0], [0], [1], [0, 0, 1, 1], [], []>} : vector<32x64xf32>, vector<64x64xf32>, vector<32x64xf32> -> vector<32x64xf32>
    %184 = arith.addf %178, %183 : vector<32x64xf32>
    %185 = vector.extract_strided_slice %159 {offsets = [0, 4, 0], sizes = [2, 16, 64], strides = [1, 1, 1]} : vector<2x20x64xf32> to vector<2x16x64xf32>
    %186 = vector.shape_cast %185 : vector<2x16x64xf32> to vector<32x64xf32>
    %c4_93 = arith.constant 4 : index
    %c0_94 = arith.constant 0 : index
    %c0_95 = arith.constant 0 : index
    %187 = vector.load %arg9[%c4_93, %c0_94, %c0_95] : memref<5x64x64xf32, #tpu.memory_space<vmem>>, vector<1x64x64xf32>
    %188 = vector.shape_cast %187 : vector<1x64x64xf32> to vector<64x64xf32>
    %cst_96 = arith.constant dense<0.000000e+00> : vector<32x64xf32>
    %189 = tpu.matmul %186, %188, %cst_96 {dimension_numbers = #tpu.dot_dimension_numbers<[1], [0], [0], [1], [0, 0, 1, 1], [], []>} : vector<32x64xf32>, vector<64x64xf32>, vector<32x64xf32> -> vector<32x64xf32>
    %190 = arith.addf %184, %189 : vector<32x64xf32>
    %c0_97 = arith.constant 0 : index
    %c0_98 = arith.constant 0 : index
    %191 = vector.load %arg10[%c0_97, %c0_98] : memref<1x64xf32, #tpu.memory_space<vmem>>, vector<1x64xf32>
    %192 = vector.broadcast %191 : vector<1x64xf32> to vector<32x64xf32>
    %193 = arith.addf %190, %192 : vector<32x64xf32>
    %cst_99 = arith.constant 0.000000e+00 : f32
    %194 = vector.broadcast %cst_99 : f32 to vector<32x64xf32>
    %195 = arith.cmpf ogt, %193, %194 : vector<32x64xf32>
    %cst_100 = arith.constant 0.000000e+00 : f32
    %196 = vector.broadcast %cst_100 : f32 to vector<32x64xf32>
    %197 = arith.minimumf %193, %196 : vector<32x64xf32>
    %198 = math.exp %197 : vector<32x64xf32>
    %cst_101 = arith.constant 1.000000e+00 : f32
    %199 = vector.broadcast %cst_101 : f32 to vector<32x64xf32>
    %200 = arith.subf %198, %199 : vector<32x64xf32>
    %201 = arith.select %195, %193, %200 : vector<32x64xi1>, vector<32x64xf32>
    %c0_102 = arith.constant 0 : index
    %c0_103 = arith.constant 0 : index
    %202 = vector.load %arg11[%c0_102, %c0_103] : memref<32x3xf32, #tpu.memory_space<vmem>>, vector<32x3xf32>
    %cst_104 = arith.constant dense<0.000000e+00> : vector<32x3xf32>
    %203 = tpu.matmul %105, %202, %cst_104 {dimension_numbers = #tpu.dot_dimension_numbers<[1], [0], [0], [1], [0, 0, 1, 1], [], []>} : vector<32x32xf32>, vector<32x3xf32>, vector<32x3xf32> -> vector<32x3xf32>
    %c0_105 = arith.constant 0 : index
    %c0_106 = arith.constant 0 : index
    %204 = vector.load %arg12[%c0_105, %c0_106] : memref<64x3xf32, #tpu.memory_space<vmem>>, vector<64x3xf32>
    %cst_107 = arith.constant dense<0.000000e+00> : vector<32x3xf32>
    %205 = tpu.matmul %201, %204, %cst_107 {dimension_numbers = #tpu.dot_dimension_numbers<[1], [0], [0], [1], [0, 0, 1, 1], [], []>} : vector<32x64xf32>, vector<64x3xf32>, vector<32x3xf32> -> vector<32x3xf32>
    %206 = arith.addf %203, %205 : vector<32x3xf32>
    %c0_108 = arith.constant 0 : index
    %c0_109 = arith.constant 0 : index
    %207 = vector.load %arg13[%c0_108, %c0_109] : memref<1x3xf32, #tpu.memory_space<vmem>>, vector<1x3xf32>
    %208 = vector.broadcast %207 : vector<1x3xf32> to vector<32x3xf32>
    %209 = arith.addf %206, %208 : vector<32x3xf32>
    %cst_110 = arith.constant 0.000000e+00 : f32
    %210 = vector.broadcast %cst_110 : f32 to vector<32x3xf32>
    %211 = arith.cmpf ogt, %209, %210 : vector<32x3xf32>
    %cst_111 = arith.constant 0.000000e+00 : f32
    %212 = vector.broadcast %cst_111 : f32 to vector<32x3xf32>
    %213 = arith.minimumf %209, %212 : vector<32x3xf32>
    %214 = math.exp %213 : vector<32x3xf32>
    %cst_112 = arith.constant 1.000000e+00 : f32
    %215 = vector.broadcast %cst_112 : f32 to vector<32x3xf32>
    %216 = arith.subf %214, %215 : vector<32x3xf32>
    %217 = arith.select %211, %209, %216 : vector<32x3xi1>, vector<32x3xf32>
    %218 = tpu.transpose %217, [1, 0] : vector<32x3xf32> -> vector<3x32xf32>
    %c0_113 = arith.constant 0 : index
    %c0_114 = arith.constant 0 : index
    %219 = vector.load %arg14[%c0_113, %c0_114] : memref<3x32xf32, #tpu.memory_space<vmem>>, vector<3x32xf32>
    tpu.vector_store %arg14[%c0_113, %c0_114], %218 {strides = array<i32>} : memref<3x32xf32, #tpu.memory_space<vmem>>, vector<3x32xf32>,
    %220 = vector.shape_cast %217 : vector<32x3xf32> to vector<1x32x3xf32>
    %cst_115 = arith.constant dense<0.000000e+00> : vector<1xf32>
    %221 = vector.multi_reduction <add>, %220, %cst_115 [1, 2] : vector<1x32x3xf32> to vector<1xf32>
    %222 = vector.shape_cast %221 : vector<1xf32> to vector<1x1x1xf32>
    %223 = vector.extract %222[0, 0, 0] : f32 from vector<1x1x1xf32>
    %224 = arith.mulf %217, %217 : vector<32x3xf32>
    %225 = vector.shape_cast %224 : vector<32x3xf32> to vector<1x32x3xf32>
    %cst_116 = arith.constant dense<0.000000e+00> : vector<1xf32>
    %226 = vector.multi_reduction <add>, %225, %cst_116 [1, 2] : vector<1x32x3xf32> to vector<1xf32>
    %227 = vector.shape_cast %226 : vector<1xf32> to vector<1x1x1xf32>
    %228 = vector.extract %227[0, 0, 0] : f32 from vector<1x1x1xf32>
    %229 = tpu.iota {dimensions = array<i32: 0>} : vector<8x128xi32>
    %230 = tpu.iota {dimensions = array<i32: 1>} : vector<8x128xi32>
    %c0_i32 = arith.constant 0 : i32
    %231 = vector.broadcast %c0_i32 : i32 to vector<8x128xi32>
    %232 = arith.cmpi eq, %229, %231 : vector<8x128xi32>
    %c0_i32_117 = arith.constant 0 : i32
    %233 = vector.broadcast %c0_i32_117 : i32 to vector<8x128xi32>
    %234 = arith.cmpi eq, %230, %233 : vector<8x128xi32>
    %235 = arith.andi %232, %234 : vector<8x128xi1>
    %cst_118 = arith.constant 0.000000e+00 : f32
    %236 = vector.broadcast %223 : f32 to vector<8x128xf32>
    %237 = vector.broadcast %cst_118 : f32 to vector<8x128xf32>
    %238 = arith.select %235, %236, %237 : vector<8x128xi1>, vector<8x128xf32>
    %c0_i32_119 = arith.constant 0 : i32
    %239 = vector.broadcast %c0_i32_119 : i32 to vector<8x128xi32>
    %240 = arith.cmpi eq, %229, %239 : vector<8x128xi32>
    %c1_i32 = arith.constant 1 : i32
    %241 = vector.broadcast %c1_i32 : i32 to vector<8x128xi32>
    %242 = arith.cmpi eq, %230, %241 : vector<8x128xi32>
    %243 = arith.andi %240, %242 : vector<8x128xi1>
    %244 = vector.broadcast %228 : f32 to vector<8x128xf32>
    %245 = arith.select %243, %244, %238 : vector<8x128xi1>, vector<8x128xf32>
    %c0_120 = arith.constant 0 : index
    %c0_121 = arith.constant 0 : index
    %246 = vector.load %arg15[%c0_120, %c0_121] : memref<8x128xf32, #tpu.memory_space<vmem>>, vector<8x128xf32>
    tpu.vector_store %arg15[%c0_120, %c0_121], %245 {strides = array<i32>} : memref<8x128xf32, #tpu.memory_space<vmem>>, vector<8x128xf32>,
    return
  }
  func.func @transform_0(%arg0: i32) -> (i32, i32, i32) {
    %c0_i32 = arith.constant 0 : i32
    %c0_i32_0 = arith.constant 0 : i32
    %c0_i32_1 = arith.constant 0 : i32
    return %arg0, %c0_i32, %c0_i32_0 : i32, i32, i32
  }
  func.func @transform_1(%arg0: i32) -> (i32, i32, i32) {
    %c0_i32 = arith.constant 0 : i32
    %c0_i32_0 = arith.constant 0 : i32
    %c0_i32_1 = arith.constant 0 : i32
    return %arg0, %c0_i32, %c0_i32_0 : i32, i32, i32
  }
  func.func @transform_2(%arg0: i32) -> (i32, i32, i32) {
    %c0_i32 = arith.constant 0 : i32
    %c0_i32_0 = arith.constant 0 : i32
    %c0_i32_1 = arith.constant 0 : i32
    %c0_i32_2 = arith.constant 0 : i32
    return %c0_i32, %c0_i32_0, %c0_i32_1 : i32, i32, i32
  }
  func.func @transform_3(%arg0: i32) -> (i32, i32) {
    %c0_i32 = arith.constant 0 : i32
    %c0_i32_0 = arith.constant 0 : i32
    %c0_i32_1 = arith.constant 0 : i32
    return %c0_i32, %c0_i32_0 : i32, i32
  }
  func.func @transform_4(%arg0: i32) -> (i32, i32, i32) {
    %c0_i32 = arith.constant 0 : i32
    %c0_i32_0 = arith.constant 0 : i32
    %c0_i32_1 = arith.constant 0 : i32
    %c0_i32_2 = arith.constant 0 : i32
    return %c0_i32, %c0_i32_0, %c0_i32_1 : i32, i32, i32
  }
  func.func @transform_5(%arg0: i32) -> (i32, i32) {
    %c0_i32 = arith.constant 0 : i32
    %c0_i32_0 = arith.constant 0 : i32
    %c0_i32_1 = arith.constant 0 : i32
    return %c0_i32, %c0_i32_0 : i32, i32
  }
  func.func @transform_6(%arg0: i32) -> (i32, i32, i32) {
    %c0_i32 = arith.constant 0 : i32
    %c0_i32_0 = arith.constant 0 : i32
    %c0_i32_1 = arith.constant 0 : i32
    %c0_i32_2 = arith.constant 0 : i32
    return %c0_i32, %c0_i32_0, %c0_i32_1 : i32, i32, i32
  }
  func.func @transform_7(%arg0: i32) -> (i32, i32) {
    %c0_i32 = arith.constant 0 : i32
    %c0_i32_0 = arith.constant 0 : i32
    %c0_i32_1 = arith.constant 0 : i32
    return %c0_i32, %c0_i32_0 : i32, i32
  }
  func.func @transform_8(%arg0: i32) -> (i32, i32, i32) {
    %c0_i32 = arith.constant 0 : i32
    %c0_i32_0 = arith.constant 0 : i32
    %c0_i32_1 = arith.constant 0 : i32
    %c0_i32_2 = arith.constant 0 : i32
    return %c0_i32, %c0_i32_0, %c0_i32_1 : i32, i32, i32
  }
  func.func @transform_9(%arg0: i32) -> (i32, i32) {
    %c0_i32 = arith.constant 0 : i32
    %c0_i32_0 = arith.constant 0 : i32
    %c0_i32_1 = arith.constant 0 : i32
    return %c0_i32, %c0_i32_0 : i32, i32
  }
  func.func @transform_10(%arg0: i32) -> (i32, i32) {
    %c0_i32 = arith.constant 0 : i32
    %c0_i32_0 = arith.constant 0 : i32
    %c0_i32_1 = arith.constant 0 : i32
    return %c0_i32, %c0_i32_0 : i32, i32
  }
  func.func @transform_11(%arg0: i32) -> (i32, i32) {
    %c0_i32 = arith.constant 0 : i32
    %c0_i32_0 = arith.constant 0 : i32
    %c0_i32_1 = arith.constant 0 : i32
    return %c0_i32, %c0_i32_0 : i32, i32
  }
  func.func @transform_12(%arg0: i32) -> (i32, i32) {
    %c0_i32 = arith.constant 0 : i32
    %c0_i32_0 = arith.constant 0 : i32
    %c0_i32_1 = arith.constant 0 : i32
    return %c0_i32, %c0_i32_0 : i32, i32
  }
  func.func @transform_13(%arg0: i32) -> (i32, i32) {
    %c0_i32 = arith.constant 0 : i32
    %c0_i32_0 = arith.constant 0 : i32
    return %c0_i32, %arg0 : i32, i32
  }
  func.func @transform_14(%arg0: i32) -> (i32, i32) {
    %c0_i32 = arith.constant 0 : i32
    %c0_i32_0 = arith.constant 0 : i32
    return %arg0, %c0_i32 : i32, i32
  }
}

</mosaic_0001>

<llo_original>
// kernel: tpu_custom_call.1
$region0: #{tpu_custom_call.1}
  #allocation0 [shape = 'u32[]', space=smem, size = 0x4, offset = 0x4, fixed_abs, tag = 'smem constant byte address 0x4 - core index']
  #allocation1 [shape = 'u32[144,128]{1,0:T(1,128)}', space=vmem, size = 0x12000, scoped, tag = 'internal scratch']
  %s0 = inlined_call_operand.vmem [shape: f32[2,16,1], index: 0, kind: input, shape index: {}]
  %s1 = inlined_call_operand.vmem [shape: f32[2,16,1], index: 1, kind: input, shape index: {}]
  %s2 = inlined_call_operand.vmem [shape: f32[5,1,32], index: 2, kind: input, shape index: {}]
  %s3 = inlined_call_operand.vmem [shape: f32[1,32], index: 3, kind: input, shape index: {}]
  %s4 = inlined_call_operand.vmem [shape: f32[5,1,64], index: 4, kind: input, shape index: {}]
  %s5 = inlined_call_operand.vmem [shape: f32[1,64], index: 5, kind: input, shape index: {}]
  %s6 = inlined_call_operand.vmem [shape: f32[5,32,32], index: 6, kind: input, shape index: {}]
  %s7 = inlined_call_operand.vmem [shape: f32[1,32], index: 7, kind: input, shape index: {}]
  %s8 = inlined_call_operand.hbm [shape: f32[5,64,64], index: 8, kind: input, shape index: {}]
  %s9 = inlined_call_operand.vmem [shape: f32[1,64], index: 9, kind: input, shape index: {}]
  %s10 = inlined_call_operand.vmem [shape: f32[32,3], index: 10, kind: input, shape index: {}]
  %s11 = inlined_call_operand.vmem [shape: f32[64,3], index: 11, kind: input, shape index: {}]
  %s12 = inlined_call_operand.vmem [shape: f32[1,3], index: 12, kind: input, shape index: {}]
  %s13 = inlined_call_operand.hbm [shape: f32[3,32], index: 13, kind: output, shape index: {0}]
  %s14 = inlined_call_operand.hbm [shape: f32[8,128], index: 14, kind: output, shape index: {1}]
  %15 = xla_tuple %s13, %s14
  %s16 = sld [smem:[#allocation0]]
  $region74: #{tpu_custom_call.1} parent=0
    _
  %s18 = ssub.s32 1, %s16
  %s19 = scalar_select 0, %s18, %s16
  $region1: #{tpu_custom_call.1} parent=0
    #allocation2 [shape = 'u8[163840]{0}', space=vmem, size = 0x28000, scoped, tag = 'input window, operand 8, single buffered']
    #allocation3 [shape = 's32[1]{0}', space=sflag, size = 0x4, scoped, tag = 'scoped memory for tpu_custom_call.1']
    #allocation4 [shape = 's32[1]{0}', space=sflag, size = 0x4, scoped, tag = 'scoped memory for tpu_custom_call.1']
    #allocation5 [shape = 'u8[2048]{0}', space=vmem, size = 0x800, scoped, tag = 'output window, operand 0, single buffered']
    #allocation6 [shape = 'u8[4096]{0}', space=vmem, size = 0x1000, scoped, tag = 'output window, operand 1, single buffered']
    #allocation7 [shape = 's32[1]{0}', space=sflag, size = 0x4, scoped, tag = 'scoped memory for tpu_custom_call.1']
    %20 = vsyncpa [#allocation3], 0
    %21 = vsyncpa [#allocation4], 0
    %22 = vsyncpa [#allocation7], 0
    // Predicated region
    $region2: #{tpu_custom_call.1} parent=1 // pred_check
      _
    $region3: #{tpu_custom_call.1} parent=1 // pred_check_branch
      %24 = sbr.rel (0) target = $region5
    $region4: #{tpu_custom_call.1} parent=1 // pred_region
      _
    $region5: #{tpu_custom_call.1} parent=1 // pred_fallthru
      _
    // Predicated region
    $region6: #{tpu_custom_call.1} parent=1 // pred_check
      _
    $region7: #{tpu_custom_call.1} parent=1 // pred_check_branch
      %26 = sbr.rel (0) target = $region9
    $region8: #{tpu_custom_call.1} parent=1 // pred_region
      _
    $region9: #{tpu_custom_call.1} parent=1 // pred_fallthru
      _
    // Predicated region
    $region10: #{tpu_custom_call.1} parent=1 // pred_check
      _
    $region11: #{tpu_custom_call.1} parent=1 // pred_check_branch
      %28 = sbr.rel (0) target = $region13
    $region12: #{tpu_custom_call.1} parent=1 // pred_region
      _
    $region13: #{tpu_custom_call.1} parent=1 // pred_fallthru
      _
    // Predicated region
    $region14: #{tpu_custom_call.1} parent=1 // pred_check
      _
    $region15: #{tpu_custom_call.1} parent=1 // pred_check_branch
      %30 = sbr.rel (0) target = $region17
    $region16: #{tpu_custom_call.1} parent=1 // pred_region
      _
    $region17: #{tpu_custom_call.1} parent=1 // pred_fallthru
      _
    // Predicated region
    $region18: #{tpu_custom_call.1} parent=1 // pred_check
      _
    $region19: #{tpu_custom_call.1} parent=1 // pred_check_branch
      %32 = sbr.rel (0) target = $region21
    $region20: #{tpu_custom_call.1} parent=1 // pred_region
      _
    $region21: #{tpu_custom_call.1} parent=1 // pred_fallthru
      _
    // Predicated region
    $region22: #{tpu_custom_call.1} parent=1 // pred_check
      _
    $region23: #{tpu_custom_call.1} parent=1 // pred_check_branch
      %34 = sbr.rel (0) target = $region25
    $region24: #{tpu_custom_call.1} parent=1 // pred_region
      _
    $region25: #{tpu_custom_call.1} parent=1 // pred_fallthru
      _
    // Predicated region
    $region26: #{tpu_custom_call.1} parent=1 // pred_check
      _
    $region27: #{tpu_custom_call.1} parent=1 // pred_check_branch
      %36 = sbr.rel (0) target = $region29
    $region28: #{tpu_custom_call.1} parent=1 // pred_region
      _
    $region29: #{tpu_custom_call.1} parent=1 // pred_fallthru
      _
    // Predicated region
    $region30: #{tpu_custom_call.1} parent=1 // pred_check
      _
    $region31: #{tpu_custom_call.1} parent=1 // pred_check_branch
      %38 = sbr.rel (0) target = $region33
    $region32: #{tpu_custom_call.1} parent=1 // pred_region
      _
    $region33: #{tpu_custom_call.1} parent=1 // pred_fallthru
      _
    // Predicated region
    $region34: #{tpu_custom_call.1} parent=1 // pred_check
      _
    $region35: #{tpu_custom_call.1} parent=1 // pred_check_branch
      %40 = sbr.rel (0) target = $region37
    $region36: #{tpu_custom_call.1} parent=1 // pred_region
      %s42 = ssub.s32 5120, 5120
      %43 = vsyncadd [#allocation3], %s42
      %s44 = sshll.u32 [#allocation2], 4
      %s45 = int_to_ptr.vmem [resolvable:$true] %s44
      %50 = dma.hbm_to_vmem [thread:$0]  %s8, 5120, %s45, [#allocation3], 128, 128, 8
    $region37: #{tpu_custom_call.1} parent=1 // pred_fallthru
      _
    // Predicated region
    $region38: #{tpu_custom_call.1} parent=1 // pred_check
      _
    $region39: #{tpu_custom_call.1} parent=1 // pred_check_branch
      %52 = sbr.rel (0) target = $region41
    $region40: #{tpu_custom_call.1} parent=1 // pred_region
      _
    $region41: #{tpu_custom_call.1} parent=1 // pred_fallthru
      _
    // Predicated region
    $region42: #{tpu_custom_call.1} parent=1 // pred_check
      _
    $region43: #{tpu_custom_call.1} parent=1 // pred_check_branch
      %54 = sbr.rel (0) target = $region45
    $region44: #{tpu_custom_call.1} parent=1 // pred_region
      _
    $region45: #{tpu_custom_call.1} parent=1 // pred_fallthru
      _
    // Predicated region
    $region46: #{tpu_custom_call.1} parent=1 // pred_check
      _
    $region47: #{tpu_custom_call.1} parent=1 // pred_check_branch
      %56 = sbr.rel (0) target = $region49
    $region48: #{tpu_custom_call.1} parent=1 // pred_region
      _
    $region49: #{tpu_custom_call.1} parent=1 // pred_fallthru
      _
    // Predicated region
    $region50: #{tpu_custom_call.1} parent=1 // pred_check
      _
    $region51: #{tpu_custom_call.1} parent=1 // pred_check_branch
      %58 = sbr.rel (0) target = $region53
    $region52: #{tpu_custom_call.1} parent=1 // pred_region
      _
    $region53: #{tpu_custom_call.1} parent=1 // pred_fallthru
      _
    // Predicated region
    $region54: #{tpu_custom_call.1} parent=1 // pred_check
      _
    $region55: #{tpu_custom_call.1} parent=1 // pred_check_branch
      %60 = sbr.rel (0) target = $region57
    $region56: #{tpu_custom_call.1} parent=1 // pred_region
      %61 = dma.done [#allocation3], 5120
    $region57: #{tpu_custom_call.1} parent=1 // pred_fallthru
      _
    %v62 = vld [vmem:[%s0] sm:$0xff]
    %v63 = vld [vmem:[%s0 + $0x8] sm:$0xff]
    %v64 = vld [vmem:[%s0 + $0x10] sm:$0xff]
    %v65 = vld [vmem:[%s0 + $0x18] sm:$0xff]
    %v66 = vmul.f32 %v62, 2.0
    %v67 = vmul.f32 %v63, 2.0
    %v68 = vmul.f32 %v64, 2.0
    %v69 = vmul.f32 %v65, 2.0
    %v70 = vsub.f32 %v66, 1.0
    %v71 = vsub.f32 %v67, 1.0
    %v72 = vsub.f32 %v68, 1.0
    %v73 = vsub.f32 %v69, 1.0
    %v74 = vld [vmem:[%s1] sm:$0xff]
    %v75 = vld [vmem:[%s1 + $0x8] sm:$0xff]
    %v76 = vld [vmem:[%s1 + $0x10] sm:$0xff]
    %v77 = vld [vmem:[%s1 + $0x18] sm:$0xff]
    %v78 = vmul.f32 %v74, 2.0
    %v79 = vmul.f32 %v75, 2.0
    %v80 = vmul.f32 %v76, 2.0
    %v81 = vmul.f32 %v77, 2.0
    %v82 = vsub.f32 %v78, 1.0
    %v83 = vsub.f32 %v79, 1.0
    %v84 = vsub.f32 %v80, 1.0
    %v85 = vsub.f32 %v81, 1.0
    %vm90 = vcmask 1041408
    %v91 = vrot.slane %v70, 6
    %v92 = vrot.slane %v71, 6
    %v93 = vsel %vm90, %v91, %v92
    %v94 = vrot.slane %v72, 6
    %v95 = vrot.slane %v73, 6
    %v96 = vsel %vm90, %v94, %v95
    %v101 = vsel %vm90, 0.0, %v91
    %v102 = vsel %vm90, 0.0, %v94
    %v103 = vsel %vm90, %v92, 0.0
    %v104 = vsel %vm90, %v95, 0.0
    %v105 = vld [vmem:[%s3] sm:$0x1]
    %v107 = vlaneseq
    %v108 = vshrl.u32 %v107, 7
    %v109 = vsub.s32 0, %v108
    %v110 = vrot.slane %v105, %v109
    %v112 = vadd.f32 %v110, 0.0
    %114 = vset.pattern.permute.xlu0 0
    %115 = vperm.xlu0 %114, %v101
    %v116 = vpop.permute.xlu0 %115
    %118 = vset.pattern.permute.xlu0 0
    %119 = vperm.xlu0 %118, %v93
    %v120 = vpop.permute.xlu0 %119
    %123 = vset.pattern.permute.xlu0 0
    %124 = vperm.xlu0 %123, %v102
    %v125 = vpop.permute.xlu0 %124
    %127 = vset.pattern.permute.xlu0 0
    %128 = vperm.xlu0 %127, %v96
    %v129 = vpop.permute.xlu0 %128
    %v131 = vld [vmem:[%s2] sm:$0x1]
    %v133 = vlaneseq
    %v134 = vshrl.u32 %v133, 7
    %v135 = vsub.s32 0, %v134
    %v136 = vrot.slane %v131, %v135
    %v138 = vmul.f32 %v116, %v136
    %v139 = vmul.f32 %v120, %v136
    %v140 = vmul.f32 %v125, %v136
    %v141 = vmul.f32 %v129, %v136
    %v142 = vadd.f32 %v112, %v138
    %v143 = vadd.f32 %v112, %v139
    %v144 = vadd.f32 %v112, %v140
    %v145 = vadd.f32 %v112, %v141
    %147 = vset.pattern.permute.xlu0 0
    %148 = vperm.xlu0 %147, %v103
    %v149 = vpop.permute.xlu0 %148
    %152 = vset.pattern.permute.xlu0 0
    %153 = vperm.xlu0 %152, %v104
    %v154 = vpop.permute.xlu0 %153
    %s156 = scalar_lea.vmem %s2, 1
    %v157 = vld [vmem:[%s156] sm:$0x1]
    %v159 = vlaneseq
    %v160 = vshrl.u32 %v159, 7
    %v161 = vsub.s32 0, %v160
    %v162 = vrot.slane %v157, %v161
    %v164 = vmul.f32 %v116, %v162
    %v165 = vmul.f32 %v120, %v162
    %v166 = vmul.f32 %v149, %v162
    %v167 = vmul.f32 %v125, %v162
    %v168 = vmul.f32 %v129, %v162
    %v169 = vmul.f32 %v154, %v162
    %vm176 = vcmask 1046528
    %v177 = vrot.slane %v164, 1
    %v178 = vrot.slane %v165, 1
    %v179 = vsel %vm176, %v177, %v178
    %v180 = vrot.slane %v166, 1
    %v181 = vsel %vm176, %v178, %v180
    %v182 = vrot.slane %v167, 1
    %v183 = vrot.slane %v168, 1
    %v184 = vsel %vm176, %v182, %v183
    %v185 = vrot.slane %v169, 1
    %v186 = vsel %vm176, %v183, %v185
    %v191 = vadd.f32 %v142, %v179
    %v192 = vadd.f32 %v143, %v181
    %v193 = vadd.f32 %v144, %v184
    %v194 = vadd.f32 %v145, %v186
    %s195 = scalar_lea.vmem %s2, 2
    %v196 = vld [vmem:[%s195] sm:$0x1]
    %v198 = vlaneseq
    %v199 = vshrl.u32 %v198, 7
    %v200 = vsub.s32 0, %v199
    %v201 = vrot.slane %v196, %v200
    %v203 = vmul.f32 %v116, %v201
    %v204 = vmul.f32 %v120, %v201
    %v205 = vmul.f32 %v149, %v201
    %v206 = vmul.f32 %v125, %v201
    %v207 = vmul.f32 %v129, %v201
    %v208 = vmul.f32 %v154, %v201
    %vm215 = vcmask 1045504
    %v216 = vrot.slane %v203, 2
    %v217 = vrot.slane %v204, 2
    %v218 = vsel %vm215, %v216, %v217
    %v219 = vrot.slane %v205, 2
    %v220 = vsel %vm215, %v217, %v219
    %v221 = vrot.slane %v206, 2
    %v222 = vrot.slane %v207, 2
    %v223 = vsel %vm215, %v221, %v222
    %v224 = vrot.slane %v208, 2
    %v225 = vsel %vm215, %v222, %v224
    %v230 = vadd.f32 %v191, %v218
    %v231 = vadd.f32 %v192, %v220
    %v232 = vadd.f32 %v193, %v223
    %v233 = vadd.f32 %v194, %v225
    %s234 = scalar_lea.vmem %s2, 3
    %v235 = vld [vmem:[%s234] sm:$0x1]
    %v237 = vlaneseq
    %v238 = vshrl.u32 %v237, 7
    %v239 = vsub.s32 0, %v238
    %v240 = vrot.slane %v235, %v239
    %v242 = vmul.f32 %v116, %v240
    %v243 = vmul.f32 %v120, %v240
    %v244 = vmul.f32 %v149, %v240
    %v245 = vmul.f32 %v125, %v240
    %v246 = vmul.f32 %v129, %v240
    %v247 = vmul.f32 %v154, %v240
    %vm254 = vcmask 1044480
    %v255 = vrot.slane %v242, 3
    %v256 = vrot.slane %v243, 3
    %v257 = vsel %vm254, %v255, %v256
    %v258 = vrot.slane %v244, 3
    %v259 = vsel %vm254, %v256, %v258
    %v260 = vrot.slane %v245, 3
    %v261 = vrot.slane %v246, 3
    %v262 = vsel %vm254, %v260, %v261
    %v263 = vrot.slane %v247, 3
    %v264 = vsel %vm254, %v261, %v263
    %v269 = vadd.f32 %v230, %v257
    %v270 = vadd.f32 %v231, %v259
    %v271 = vadd.f32 %v232, %v262
    %v272 = vadd.f32 %v233, %v264
    %s273 = scalar_lea.vmem %s2, 4
    %v274 = vld [vmem:[%s273] sm:$0x1]
    %v276 = vlaneseq
    %v277 = vshrl.u32 %v276, 7
    %v278 = vsub.s32 0, %v277
    %v279 = vrot.slane %v274, %v278
    %v281 = vmul.f32 %v116, %v279
    %v282 = vmul.f32 %v120, %v279
    %v283 = vmul.f32 %v149, %v279
    %v284 = vmul.f32 %v125, %v279
    %v285 = vmul.f32 %v129, %v279
    %v286 = vmul.f32 %v154, %v279
    %vm293 = vcmask 1043456
    %v294 = vrot.slane %v281, 4
    %v295 = vrot.slane %v282, 4
    %v296 = vsel %vm293, %v294, %v295
    %v297 = vrot.slane %v283, 4
    %v298 = vsel %vm293, %v295, %v297
    %v299 = vrot.slane %v284, 4
    %v300 = vrot.slane %v285, 4
    %v301 = vsel %vm293, %v299, %v300
    %v302 = vrot.slane %v286, 4
    %v303 = vsel %vm293, %v300, %v302
    %v308 = vadd.f32 %v269, %v296
    %v309 = vadd.f32 %v270, %v298
    %v310 = vadd.f32 %v271, %v301
    %v311 = vadd.f32 %v272, %v303
    %vm312 = vcmp.gt.f32.partialorder %v308, 0.0
    %vm313 = vcmp.gt.f32.partialorder %v309, 0.0
    %vm314 = vcmp.gt.f32.partialorder %v310, 0.0
    %vm315 = vcmp.gt.f32.partialorder %v311, 0.0
    %v316 = vmin.f32 %v308, 0.0
    %v317 = vmin.f32 %v309, 0.0
    %v318 = vmin.f32 %v310, 0.0
    %v319 = vmin.f32 %v311, 0.0
    %v320 = vmul.f32 %v316, 1.442695
    %v321 = vpow.pop %v320
    %v322 = vmul.f32 %v317, 1.442695
    %v323 = vpow.pop %v322
    %v324 = vmul.f32 %v318, 1.442695
    %v325 = vpow.pop %v324
    %v326 = vmul.f32 %v319, 1.442695
    %v327 = vpow.pop %v326
    %v328 = vsub.f32 %v321, 1.0
    %v329 = vsub.f32 %v323, 1.0
    %v330 = vsub.f32 %v325, 1.0
    %v331 = vsub.f32 %v327, 1.0
    %v332 = vsel %vm312, %v308, %v328
    %v333 = vsel %vm313, %v309, %v329
    %v334 = vsel %vm314, %v310, %v330
    %v335 = vsel %vm315, %v311, %v331
    %v340 = vrot.slane %v332, 6
    %v341 = vrot.slane %v333, 6
    %v342 = vsel %vm90, %v340, %v341
    %v343 = vrot.slane %v334, 6
    %v344 = vrot.slane %v335, 6
    %v345 = vsel %vm90, %v343, %v344
    %v350 = vsel %vm90, 0.0, %v340
    %v351 = vsel %vm90, 0.0, %v343
    %v352 = vsel %vm90, %v341, 0.0
    %v353 = vsel %vm90, %v344, 0.0
    %v354 = vld [vmem:[%s6] sm:$0xff]
    %v355 = vld [vmem:[%s6 + $0x8] sm:$0xff]
    %v356 = vld [vmem:[%s6 + $0x10] sm:$0xff]
    %v357 = vld [vmem:[%s6 + $0x18] sm:$0xff]
    %v362 = vrot.slane %v350, 1
    %v363 = vrot.slane %v342, 1
    %v364 = vsel %vm176, %v362, %v363
    %v365 = vrot.slane %v352, 1
    %v366 = vsel %vm176, %v363, %v365
    %v367 = vrot.slane %v351, 1
    %v368 = vrot.slane %v345, 1
    %v369 = vsel %vm176, %v367, %v368
    %v370 = vrot.slane %v353, 1
    %v371 = vsel %vm176, %v368, %v370
    %s372 = scalar_lea.vmem %s6, 32
    %v373 = vld [vmem:[%s372] sm:$0xff]
    %v374 = vld [vmem:[%s372 + $0x8] sm:$0xff]
    %v375 = vld [vmem:[%s372 + $0x10] sm:$0xff]
    %v376 = vld [vmem:[%s372 + $0x18] sm:$0xff]
    %vm377 = vcmask 261120
    %v378 = vsel %vm377, %v364, 0
    %v380 = vsel %vm377, %v366, 0
    %v382 = vsel %vm377, %v369, 0
    %v384 = vsel %vm377, %v371, 0
    %386 = vmatprep.subr.mxu0 0.0
    %387 = vmatpush1.msra.mxu0 %v373
    %388 = vmatprep.subr.mxu0 0.0
    %389 = vmatpush1.msra.mxu0 %v374
    %390 = vmatprep.subr.mxu0 0.0
    %391 = vmatpush1.msra.mxu0 %v375
    %392 = vmatprep.subr.mxu0 0.0
    %393 = vmatpush1.msra.mxu0 %v376
    %394 = vmatprep.subr.mxu0 0.0
    %395 = vmatpush1.msra.mxu0 0.0
    %396 = vmatprep.subr.mxu0 0.0
    %397 = vmatpush1.msra.mxu0 0.0
    %398 = vmatprep.subr.mxu0 0.0
    %399 = vmatpush1.msra.mxu0 0.0
    %400 = vmatprep.subr.mxu0 0.0
    %401 = vmatpush1.msra.mxu0 0.0
    %402 = vmatprep.subr.mxu0 0.0
    %403 = vmatpush1.msra.mxu0 0.0
    %404 = vmatprep.subr.mxu0 0.0
    %405 = vmatpush1.msra.mxu0 0.0
    %406 = vmatprep.subr.mxu0 0.0
    %407 = vmatpush1.msra.mxu0 0.0
    %408 = vmatprep.subr.mxu0 0.0
    %409 = vmatpush1.msra.mxu0 0.0
    %410 = vmatprep.subr.mxu0 0.0
    %411 = vmatpush1.msra.mxu0 0.0
    %412 = vmatprep.subr.mxu0 0.0
    %413 = vmatpush1.msra.mxu0 0.0
    %414 = vmatprep.subr.mxu0 0.0
    %415 = vmatpush1.msra.mxu0 0.0
    %416 = vmatprep.subr.mxu0 0.0
    %417 = vmatpush1.msra.mxu0 0.0
    %418 = vmatprep.subr.mxu0 0.0
    %419 = vmatpush1.msra.mxu0 0.0
    %420 = vmatprep.subr.mxu0 0.0
    %421 = vmatpush1.msra.mxu0 0.0
    %422 = vmatprep.subr.mxu0 0.0
    %423 = vmatpush1.msra.mxu0 0.0
    %424 = vmatprep.subr.mxu0 0.0
    %425 = vmatpush1.msra.mxu0 0.0
    %426 = vmatprep.subr.mxu0 0.0
    %427 = vmatpush1.msra.mxu0 0.0
    %428 = vmatprep.subr.mxu0 0.0
    %429 = vmatpush1.msra.mxu0 0.0
    %430 = vmatprep.subr.mxu0 0.0
    %431 = vmatpush1.msra.mxu0 0.0
    %432 = vmatprep.subr.mxu0 0.0
    %433 = vmatpush1.msra.mxu0 0.0
    %434 = vmatprep.subr.mxu0 0.0
    %435 = vmatpush1.msra.mxu0 0.0
    %436 = vmatprep.subr.mxu0 0.0
    %437 = vmatpush1.msra.mxu0 0.0
    %438 = vmatprep.subr.mxu0 0.0
    %439 = vmatpush1.msra.mxu0 0.0
    %440 = vmatprep.subr.mxu0 0.0
    %441 = vmatpush1.msra.mxu0 0.0
    %442 = vmatprep.subr.mxu0 0.0
    %443 = vmatpush1.msra.mxu0 0.0
    %444 = vmatprep.subr.mxu0 0.0
    %445 = vmatpush1.msra.mxu0 0.0
    %446 = vmatprep.subr.mxu0 0.0
    %447 = vmatpush1.msra.mxu0 0.0
    %448 = vmatprep.subr.mxu0 0.0
    %449 = vmatpush1.msra.mxu0 0.0
    %450 = vmatprep.mubr.f32.mxu0 0.0
    %451 = vmatmul.mubr.f32.gmra.mrb[0].mxu0 %v378
    %v452 = vpop.f32.mrb[0].mxu0
    %v453 = vadd.f32 0.0, %v452
    %v454 = vpop.f32.mrb[0].mxu0
    %455 = vmatprep.mubr.f32.mxu0 0.0
    %456 = vmatmul.mubr.f32.gmra.mrb[0].mxu0 %v380
    %v457 = vpop.f32.mrb[0].mxu0
    %v458 = vadd.f32 0.0, %v457
    %v459 = vpop.f32.mrb[0].mxu0
    %460 = vmatprep.mubr.f32.mxu0 0.0
    %461 = vmatmul.mubr.f32.gmra.mrb[0].mxu0 %v382
    %v462 = vpop.f32.mrb[0].mxu0
    %v463 = vadd.f32 0.0, %v462
    %v464 = vpop.f32.mrb[0].mxu0
    %465 = vmatprep.mubr.f32.mxu0 0.0
    %466 = vmatmul.mubr.f32.gmra.mrb[0].mxu0 %v384
    %v467 = vpop.f32.mrb[0].mxu0
    %v468 = vadd.f32 0.0, %v467
    %v469 = vpop.f32.mrb[0].mxu0
    %470 = vdwg.mxu0
    %v471 = vsel %vm377, %v350, 0
    %v473 = vsel %vm377, %v342, 0
    %v475 = vsel %vm377, %v351, 0
    %v477 = vsel %vm377, %v345, 0
    %479 = vmatprep.subr.mxu0 0.0
    %480 = vmatpush1.msra.mxu0 %v354
    %481 = vmatprep.subr.mxu0 0.0
    %482 = vmatpush1.msra.mxu0 %v355
    %483 = vmatprep.subr.mxu0 0.0
    %484 = vmatpush1.msra.mxu0 %v356
    %485 = vmatprep.subr.mxu0 0.0
    %486 = vmatpush1.msra.mxu0 %v357
    %487 = vmatprep.subr.mxu0 0.0
    %488 = vmatpush1.msra.mxu0 0.0
    %489 = vmatprep.subr.mxu0 0.0
    %490 = vmatpush1.msra.mxu0 0.0
    %491 = vmatprep.subr.mxu0 0.0
    %492 = vmatpush1.msra.mxu0 0.0
    %493 = vmatprep.subr.mxu0 0.0
    %494 = vmatpush1.msra.mxu0 0.0
    %495 = vmatprep.subr.mxu0 0.0
    %496 = vmatpush1.msra.mxu0 0.0
    %497 = vmatprep.subr.mxu0 0.0
    %498 = vmatpush1.msra.mxu0 0.0
    %499 = vmatprep.subr.mxu0 0.0
    %500 = vmatpush1.msra.mxu0 0.0
    %501 = vmatprep.subr.mxu0 0.0
    %502 = vmatpush1.msra.mxu0 0.0
    %503 = vmatprep.subr.mxu0 0.0
    %504 = vmatpush1.msra.mxu0 0.0
    %505 = vmatprep.subr.mxu0 0.0
    %506 = vmatpush1.msra.mxu0 0.0
    %507 = vmatprep.subr.mxu0 0.0
    %508 = vmatpush1.msra.mxu0 0.0
    %509 = vmatprep.subr.mxu0 0.0
    %510 = vmatpush1.msra.mxu0 0.0
    %511 = vmatprep.subr.mxu0 0.0
    %512 = vmatpush1.msra.mxu0 0.0
    %513 = vmatprep.subr.mxu0 0.0
    %514 = vmatpush1.msra.mxu0 0.0
    %515 = vmatprep.subr.mxu0 0.0
    %516 = vmatpush1.msra.mxu0 0.0
    %517 = vmatprep.subr.mxu0 0.0
    %518 = vmatpush1.msra.mxu0 0.0
    %519 = vmatprep.subr.mxu0 0.0
    %520 = vmatpush1.msra.mxu0 0.0
    %521 = vmatprep.subr.mxu0 0.0
    %522 = vmatpush1.msra.mxu0 0.0
    %523 = vmatprep.subr.mxu0 0.0
    %524 = vmatpush1.msra.mxu0 0.0
    %525 = vmatprep.subr.mxu0 0.0
    %526 = vmatpush1.msra.mxu0 0.0
    %527 = vmatprep.subr.mxu0 0.0
    %528 = vmatpush1.msra.mxu0 0.0
    %529 = vmatprep.subr.mxu0 0.0
    %530 = vmatpush1.msra.mxu0 0.0
    %531 = vmatprep.subr.mxu0 0.0
    %532 = vmatpush1.msra.mxu0 0.0
    %533 = vmatprep.subr.mxu0 0.0
    %534 = vmatpush1.msra.mxu0 0.0
    %535 = vmatprep.subr.mxu0 0.0
    %536 = vmatpush1.msra.mxu0 0.0
    %537 = vmatprep.subr.mxu0 0.0
    %538 = vmatpush1.msra.mxu0 0.0
    %539 = vmatprep.subr.mxu0 0.0
    %540 = vmatpush1.msra.mxu0 0.0
    %541 = vmatprep.subr.mxu0 0.0
    %542 = vmatpush1.msra.mxu0 0.0
    %543 = vmatprep.mubr.f32.mxu0 0.0
    %544 = vmatmul.mubr.f32.gmra.mrb[0].mxu0 %v471
    %v545 = vpop.f32.mrb[0].mxu0
    %v546 = vadd.f32 %v453, %v545
    %v547 = vpop.f32.mrb[0].mxu0
    %548 = vmatprep.mubr.f32.mxu0 0.0
    %549 = vmatmul.mubr.f32.gmra.mrb[0].mxu0 %v473
    %v550 = vpop.f32.mrb[0].mxu0
    %v551 = vadd.f32 %v458, %v550
    %v552 = vpop.f32.mrb[0].mxu0
    %553 = vmatprep.mubr.f32.mxu0 0.0
    %554 = vmatmul.mubr.f32.gmra.mrb[0].mxu0 %v475
    %v555 = vpop.f32.mrb[0].mxu0
    %v556 = vadd.f32 %v463, %v555
    %v557 = vpop.f32.mrb[0].mxu0
    %558 = vmatprep.mubr.f32.mxu0 0.0
    %559 = vmatmul.mubr.f32.gmra.mrb[0].mxu0 %v477
    %v560 = vpop.f32.mrb[0].mxu0
    %v561 = vadd.f32 %v468, %v560
    %v562 = vpop.f32.mrb[0].mxu0
    %563 = vdwg.mxu0
    %v564 = vrot.slane %v350, 2
    %v565 = vrot.slane %v342, 2
    %v566 = vsel %vm215, %v564, %v565
    %v567 = vrot.slane %v352, 2
    %v568 = vsel %vm215, %v565, %v567
    %v569 = vrot.slane %v351, 2
    %v570 = vrot.slane %v345, 2
    %v571 = vsel %vm215, %v569, %v570
    %v572 = vrot.slane %v353, 2
    %v573 = vsel %vm215, %v570, %v572
    %s574 = scalar_lea.vmem %s6, 64
    %v575 = vld [vmem:[%s574] sm:$0xff]
    %v576 = vld [vmem:[%s574 + $0x8] sm:$0xff]
    %v577 = vld [vmem:[%s574 + $0x10] sm:$0xff]
    %v578 = vld [vmem:[%s574 + $0x18] sm:$0xff]
    %v579 = vsel %vm377, %v566, 0
    %v581 = vsel %vm377, %v568, 0
    %v583 = vsel %vm377, %v571, 0
    %v585 = vsel %vm377, %v573, 0
    %587 = vmatprep.subr.mxu0 0.0
    %588 = vmatpush1.msra.mxu0 %v575
    %589 = vmatprep.subr.mxu0 0.0
    %590 = vmatpush1.msra.mxu0 %v576
    %591 = vmatprep.subr.mxu0 0.0
    %592 = vmatpush1.msra.mxu0 %v577
    %593 = vmatprep.subr.mxu0 0.0
    %594 = vmatpush1.msra.mxu0 %v578
    %595 = vmatprep.subr.mxu0 0.0
    %596 = vmatpush1.msra.mxu0 0.0
    %597 = vmatprep.subr.mxu0 0.0
    %598 = vmatpush1.msra.mxu0 0.0
    %599 = vmatprep.subr.mxu0 0.0
    %600 = vmatpush1.msra.mxu0 0.0
    %601 = vmatprep.subr.mxu0 0.0
    %602 = vmatpush1.msra.mxu0 0.0
    %603 = vmatprep.subr.mxu0 0.0
    %604 = vmatpush1.msra.mxu0 0.0
    %605 = vmatprep.subr.mxu0 0.0
    %606 = vmatpush1.msra.mxu0 0.0
    %607 = vmatprep.subr.mxu0 0.0
    %608 = vmatpush1.msra.mxu0 0.0
    %609 = vmatprep.subr.mxu0 0.0
    %610 = vmatpush1.msra.mxu0 0.0
    %611 = vmatprep.subr.mxu0 0.0
    %612 = vmatpush1.msra.mxu0 0.0
    %613 = vmatprep.subr.mxu0 0.0
    %614 = vmatpush1.msra.mxu0 0.0
    %615 = vmatprep.subr.mxu0 0.0
    %616 = vmatpush1.msra.mxu0 0.0
    %617 = vmatprep.subr.mxu0 0.0
    %618 = vmatpush1.msra.mxu0 0.0
    %619 = vmatprep.subr.mxu0 0.0
    %620 = vmatpush1.msra.mxu0 0.0
    %621 = vmatprep.subr.mxu0 0.0
    %622 = vmatpush1.msra.mxu0 0.0
    %623 = vmatprep.subr.mxu0 0.0
    %624 = vmatpush1.msra.mxu0 0.0
    %625 = vmatprep.subr.mxu0 0.0
    %626 = vmatpush1.msra.mxu0 0.0
    %627 = vmatprep.subr.mxu0 0.0
    %628 = vmatpush1.msra.mxu0 0.0
    %629 = vmatprep.subr.mxu0 0.0
    %630 = vmatpush1.msra.mxu0 0.0
    %631 = vmatprep.subr.mxu0 0.0
    %632 = vmatpush1.msra.mxu0 0.0
    %633 = vmatprep.subr.mxu0 0.0
    %634 = vmatpush1.msra.mxu0 0.0
    %635 = vmatprep.subr.mxu0 0.0
    %636 = vmatpush1.msra.mxu0 0.0
    %637 = vmatprep.subr.mxu0 0.0
    %638 = vmatpush1.msra.mxu0 0.0
    %639 = vmatprep.subr.mxu0 0.0
    %640 = vmatpush1.msra.mxu0 0.0
    %641 = vmatprep.subr.mxu0 0.0
    %642 = vmatpush1.msra.mxu0 0.0
    %643 = vmatprep.subr.mxu0 0.0
    %644 = vmatpush1.msra.mxu0 0.0
    %645 = vmatprep.subr.mxu0 0.0
    %646 = vmatpush1.msra.mxu0 0.0
    %647 = vmatprep.subr.mxu0 0.0
    %648 = vmatpush1.msra.mxu0 0.0
    %649 = vmatprep.subr.mxu0 0.0
    %650 = vmatpush1.msra.mxu0 0.0
    %651 = vmatprep.mubr.f32.mxu0 0.0
    %652 = vmatmul.mubr.f32.gmra.mrb[0].mxu0 %v579
    %v653 = vpop.f32.mrb[0].mxu0
    %v654 = vadd.f32 0.0, %v653
    %v655 = vpop.f32.mrb[0].mxu0
    %656 = vmatprep.mubr.f32.mxu0 0.0
    %657 = vmatmul.mubr.f32.gmra.mrb[0].mxu0 %v581
    %v658 = vpop.f32.mrb[0].mxu0
    %v659 = vadd.f32 0.0, %v658
    %v660 = vpop.f32.mrb[0].mxu0
    %661 = vmatprep.mubr.f32.mxu0 0.0
    %662 = vmatmul.mubr.f32.gmra.mrb[0].mxu0 %v583
    %v663 = vpop.f32.mrb[0].mxu0
    %v664 = vadd.f32 0.0, %v663
    %v665 = vpop.f32.mrb[0].mxu0
    %666 = vmatprep.mubr.f32.mxu0 0.0
    %667 = vmatmul.mubr.f32.gmra.mrb[0].mxu0 %v585
    %v668 = vpop.f32.mrb[0].mxu0
    %v669 = vadd.f32 0.0, %v668
    %v670 = vpop.f32.mrb[0].mxu0
    %671 = vdwg.mxu0
    %v672 = vadd.f32 %v546, %v654
    %v673 = vadd.f32 %v551, %v659
    %v674 = vadd.f32 %v556, %v664
    %v675 = vadd.f32 %v561, %v669
    %v676 = vrot.slane %v350, 3
    %v677 = vrot.slane %v342, 3
    %v678 = vsel %vm254, %v676, %v677
    %v679 = vrot.slane %v352, 3
    %v680 = vsel %vm254, %v677, %v679
    %v681 = vrot.slane %v351, 3
    %v682 = vrot.slane %v345, 3
    %v683 = vsel %vm254, %v681, %v682
    %v684 = vrot.slane %v353, 3
    %v685 = vsel %vm254, %v682, %v684
    %s686 = scalar_lea.vmem %s6, 96
    %v687 = vld [vmem:[%s686] sm:$0xff]
    %v688 = vld [vmem:[%s686 + $0x8] sm:$0xff]
    %v689 = vld [vmem:[%s686 + $0x10] sm:$0xff]
    %v690 = vld [vmem:[%s686 + $0x18] sm:$0xff]
    %v691 = vsel %vm377, %v678, 0
    %v693 = vsel %vm377, %v680, 0
    %v695 = vsel %vm377, %v683, 0
    %v697 = vsel %vm377, %v685, 0
    %699 = vmatprep.subr.mxu0 0.0
    %700 = vmatpush1.msra.mxu0 %v687
    %701 = vmatprep.subr.mxu0 0.0
    %702 = vmatpush1.msra.mxu0 %v688
    %703 = vmatprep.subr.mxu0 0.0
    %704 = vmatpush1.msra.mxu0 %v689
    %705 = vmatprep.subr.mxu0 0.0
    %706 = vmatpush1.msra.mxu0 %v690
    %707 = vmatprep.subr.mxu0 0.0
    %708 = vmatpush1.msra.mxu0 0.0
    %709 = vmatprep.subr.mxu0 0.0
    %710 = vmatpush1.msra.mxu0 0.0
    %711 = vmatprep.subr.mxu0 0.0
    %712 = vmatpush1.msra.mxu0 0.0
    %713 = vmatprep.subr.mxu0 0.0
    %714 = vmatpush1.msra.mxu0 0.0
    %715 = vmatprep.subr.mxu0 0.0
    %716 = vmatpush1.msra.mxu0 0.0
    %717 = vmatprep.subr.mxu0 0.0
    %718 = vmatpush1.msra.mxu0 0.0
    %719 = vmatprep.subr.mxu0 0.0
    %720 = vmatpush1.msra.mxu0 0.0
    %721 = vmatprep.subr.mxu0 0.0
    %722 = vmatpush1.msra.mxu0 0.0
    %723 = vmatprep.subr.mxu0 0.0
    %724 = vmatpush1.msra.mxu0 0.0
    %725 = vmatprep.subr.mxu0 0.0
    %726 = vmatpush1.msra.mxu0 0.0
    %727 = vmatprep.subr.mxu0 0.0
    %728 = vmatpush1.msra.mxu0 0.0
    %729 = vmatprep.subr.mxu0 0.0
    %730 = vmatpush1.msra.mxu0 0.0
    %731 = vmatprep.subr.mxu0 0.0
    %732 = vmatpush1.msra.mxu0 0.0
    %733 = vmatprep.subr.mxu0 0.0
    %734 = vmatpush1.msra.mxu0 0.0
    %735 = vmatprep.subr.mxu0 0.0
    %736 = vmatpush1.msra.mxu0 0.0
    %737 = vmatprep.subr.mxu0 0.0
    %738 = vmatpush1.msra.mxu0 0.0
    %739 = vmatprep.subr.mxu0 0.0
    %740 = vmatpush1.msra.mxu0 0.0
    %741 = vmatprep.subr.mxu0 0.0
    %742 = vmatpush1.msra.mxu0 0.0
    %743 = vmatprep.subr.mxu0 0.0
    %744 = vmatpush1.msra.mxu0 0.0
    %745 = vmatprep.subr.mxu0 0.0
    %746 = vmatpush1.msra.mxu0 0.0
    %747 = vmatprep.subr.mxu0 0.0
    %748 = vmatpush1.msra.mxu0 0.0
    %749 = vmatprep.subr.mxu0 0.0
    %750 = vmatpush1.msra.mxu0 0.0
    %751 = vmatprep.subr.mxu0 0.0
    %752 = vmatpush1.msra.mxu0 0.0
    %753 = vmatprep.subr.mxu0 0.0
    %754 = vmatpush1.msra.mxu0 0.0
    %755 = vmatprep.subr.mxu0 0.0
    %756 = vmatpush1.msra.mxu0 0.0
    %757 = vmatprep.subr.mxu0 0.0
    %758 = vmatpush1.msra.mxu0 0.0
    %759 = vmatprep.subr.mxu0 0.0
    %760 = vmatpush1.msra.mxu0 0.0
    %761 = vmatprep.subr.mxu0 0.0
    %762 = vmatpush1.msra.mxu0 0.0
    %763 = vmatprep.mubr.f32.mxu0 0.0
    %764 = vmatmul.mubr.f32.gmra.mrb[0].mxu0 %v691
    %v765 = vpop.f32.mrb[0].mxu0
    %v766 = vadd.f32 0.0, %v765
    %v767 = vpop.f32.mrb[0].mxu0
    %768 = vmatprep.mubr.f32.mxu0 0.0
    %769 = vmatmul.mubr.f32.gmra.mrb[0].mxu0 %v693
    %v770 = vpop.f32.mrb[0].mxu0
    %v771 = vadd.f32 0.0, %v770
    %v772 = vpop.f32.mrb[0].mxu0
    %773 = vmatprep.mubr.f32.mxu0 0.0
    %774 = vmatmul.mubr.f32.gmra.mrb[0].mxu0 %v695
    %v775 = vpop.f32.mrb[0].mxu0
    %v776 = vadd.f32 0.0, %v775
    %v777 = vpop.f32.mrb[0].mxu0
    %778 = vmatprep.mubr.f32.mxu0 0.0
    %779 = vmatmul.mubr.f32.gmra.mrb[0].mxu0 %v697
    %v780 = vpop.f32.mrb[0].mxu0
    %v781 = vadd.f32 0.0, %v780
    %v782 = vpop.f32.mrb[0].mxu0
    %783 = vdwg.mxu0
    %v784 = vadd.f32 %v672, %v766
    %v785 = vadd.f32 %v673, %v771
    %v786 = vadd.f32 %v674, %v776
    %v787 = vadd.f32 %v675, %v781
    %v788 = vrot.slane %v350, 4
    %v789 = vrot.slane %v342, 4
    %v790 = vsel %vm293, %v788, %v789
    %v791 = vrot.slane %v352, 4
    %v792 = vsel %vm293, %v789, %v791
    %v793 = vrot.slane %v351, 4
    %v794 = vrot.slane %v345, 4
    %v795 = vsel %vm293, %v793, %v794
    %v796 = vrot.slane %v353, 4
    %v797 = vsel %vm293, %v794, %v796
    %s798 = scalar_lea.vmem %s6, 128
    %v799 = vld [vmem:[%s798] sm:$0xff]
    %v800 = vld [vmem:[%s798 + $0x8] sm:$0xff]
    %v801 = vld [vmem:[%s798 + $0x10] sm:$0xff]
    %v802 = vld [vmem:[%s798 + $0x18] sm:$0xff]
    %v803 = vsel %vm377, %v790, 0
    %v805 = vsel %vm377, %v792, 0
    %v807 = vsel %vm377, %v795, 0
    %v809 = vsel %vm377, %v797, 0
    %811 = vmatprep.subr.mxu0 0.0
    %812 = vmatpush1.msra.mxu0 %v799
    %813 = vmatprep.subr.mxu0 0.0
    %814 = vmatpush1.msra.mxu0 %v800
    %815 = vmatprep.subr.mxu0 0.0
    %816 = vmatpush1.msra.mxu0 %v801
    %817 = vmatprep.subr.mxu0 0.0
    %818 = vmatpush1.msra.mxu0 %v802
    %819 = vmatprep.subr.mxu0 0.0
    %820 = vmatpush1.msra.mxu0 0.0
    %821 = vmatprep.subr.mxu0 0.0
    %822 = vmatpush1.msra.mxu0 0.0
    %823 = vmatprep.subr.mxu0 0.0
    %824 = vmatpush1.msra.mxu0 0.0
    %825 = vmatprep.subr.mxu0 0.0
    %826 = vmatpush1.msra.mxu0 0.0
    %827 = vmatprep.subr.mxu0 0.0
    %828 = vmatpush1.msra.mxu0 0.0
    %829 = vmatprep.subr.mxu0 0.0
    %830 = vmatpush1.msra.mxu0 0.0
    %831 = vmatprep.subr.mxu0 0.0
    %832 = vmatpush1.msra.mxu0 0.0
    %833 = vmatprep.subr.mxu0 0.0
    %834 = vmatpush1.msra.mxu0 0.0
    %835 = vmatprep.subr.mxu0 0.0
    %836 = vmatpush1.msra.mxu0 0.0
    %837 = vmatprep.subr.mxu0 0.0
    %838 = vmatpush1.msra.mxu0 0.0
    %839 = vmatprep.subr.mxu0 0.0
    %840 = vmatpush1.msra.mxu0 0.0
    %841 = vmatprep.subr.mxu0 0.0
    %842 = vmatpush1.msra.mxu0 0.0
    %843 = vmatprep.subr.mxu0 0.0
    %844 = vmatpush1.msra.mxu0 0.0
    %845 = vmatprep.subr.mxu0 0.0
    %846 = vmatpush1.msra.mxu0 0.0
    %847 = vmatprep.subr.mxu0 0.0
    %848 = vmatpush1.msra.mxu0 0.0
    %849 = vmatprep.subr.mxu0 0.0
    %850 = vmatpush1.msra.mxu0 0.0
    %851 = vmatprep.subr.mxu0 0.0
    %852 = vmatpush1.msra.mxu0 0.0
    %853 = vmatprep.subr.mxu0 0.0
    %854 = vmatpush1.msra.mxu0 0.0
    %855 = vmatprep.subr.mxu0 0.0
    %856 = vmatpush1.msra.mxu0 0.0
    %857 = vmatprep.subr.mxu0 0.0
    %858 = vmatpush1.msra.mxu0 0.0
    %859 = vmatprep.subr.mxu0 0.0
    %860 = vmatpush1.msra.mxu0 0.0
    %861 = vmatprep.subr.mxu0 0.0
    %862 = vmatpush1.msra.mxu0 0.0
    %863 = vmatprep.subr.mxu0 0.0
    %864 = vmatpush1.msra.mxu0 0.0
    %865 = vmatprep.subr.mxu0 0.0
    %866 = vmatpush1.msra.mxu0 0.0
    %867 = vmatprep.subr.mxu0 0.0
    %868 = vmatpush1.msra.mxu0 0.0
    %869 = vmatprep.subr.mxu0 0.0
    %870 = vmatpush1.msra.mxu0 0.0
    %871 = vmatprep.subr.mxu0 0.0
    %872 = vmatpush1.msra.mxu0 0.0
    %873 = vmatprep.subr.mxu0 0.0
    %874 = vmatpush1.msra.mxu0 0.0
    %875 = vmatprep.mubr.f32.mxu0 0.0
    %876 = vmatmul.mubr.f32.gmra.mrb[0].mxu0 %v803
    %v877 = vpop.f32.mrb[0].mxu0
    %v878 = vadd.f32 0.0, %v877
    %v879 = vpop.f32.mrb[0].mxu0
    %880 = vmatprep.mubr.f32.mxu0 0.0
    %881 = vmatmul.mubr.f32.gmra.mrb[0].mxu0 %v805
    %v882 = vpop.f32.mrb[0].mxu0
    %v883 = vadd.f32 0.0, %v882
    %v884 = vpop.f32.mrb[0].mxu0
    %885 = vmatprep.mubr.f32.mxu0 0.0
    %886 = vmatmul.mubr.f32.gmra.mrb[0].mxu0 %v807
    %v887 = vpop.f32.mrb[0].mxu0
    %v888 = vadd.f32 0.0, %v887
    %v889 = vpop.f32.mrb[0].mxu0
    %890 = vmatprep.mubr.f32.mxu0 0.0
    %891 = vmatmul.mubr.f32.gmra.mrb[0].mxu0 %v809
    %v892 = vpop.f32.mrb[0].mxu0
    %v893 = vadd.f32 0.0, %v892
    %v894 = vpop.f32.mrb[0].mxu0
    %895 = vdwg.mxu0
    %v896 = vadd.f32 %v784, %v878
    %v897 = vadd.f32 %v785, %v883
    %v898 = vadd.f32 %v786, %v888
    %v899 = vadd.f32 %v787, %v893
    %v900 = vld [vmem:[%s7] sm:$0x1]
    %v902 = vlaneseq
    %v903 = vshrl.u32 %v902, 7
    %v904 = vsub.s32 0, %v903
    %v905 = vrot.slane %v900, %v904
    %v907 = vadd.f32 %v896, %v905
    %v908 = vadd.f32 %v897, %v905
    %v909 = vadd.f32 %v898, %v905
    %v910 = vadd.f32 %v899, %v905
    %vm911 = vcmp.gt.f32.partialorder %v907, 0.0
    %vm912 = vcmp.gt.f32.partialorder %v908, 0.0
    %vm913 = vcmp.gt.f32.partialorder %v909, 0.0
    %vm914 = vcmp.gt.f32.partialorder %v910, 0.0
    %v915 = vmin.f32 %v907, 0.0
    %v916 = vmin.f32 %v908, 0.0
    %v917 = vmin.f32 %v909, 0.0
    %v918 = vmin.f32 %v910, 0.0
    %v919 = vmul.f32 %v915, 1.442695
    %v920 = vpow.pop %v919
    %v921 = vmul.f32 %v916, 1.442695
    %v922 = vpow.pop %v921
    %v923 = vmul.f32 %v917, 1.442695
    %v924 = vpow.pop %v923
    %v925 = vmul.f32 %v918, 1.442695
    %v926 = vpow.pop %v925
    %v927 = vsub.f32 %v920, 1.0
    %v928 = vsub.f32 %v922, 1.0
    %v929 = vsub.f32 %v924, 1.0
    %v930 = vsub.f32 %v926, 1.0
    %v931 = vsel %vm911, %v907, %v927
    %v932 = vsel %vm912, %v908, %v928
    %v933 = vsel %vm913, %v909, %v929
    %v934 = vsel %vm914, %v910, %v930
    %v939 = vrot.slane %v82, 6
    %v940 = vrot.slane %v83, 6
    %v941 = vsel %vm90, %v939, %v940
    %v942 = vrot.slane %v84, 6
    %v943 = vrot.slane %v85, 6
    %v944 = vsel %vm90, %v942, %v943
    %v949 = vsel %vm90, 0.0, %v939
    %v950 = vsel %vm90, 0.0, %v942
    %v951 = vsel %vm90, %v940, 0.0
    %v952 = vsel %vm90, %v943, 0.0
    %v953 = vld [vmem:[%s5] sm:$0x1]
    %v955 = vlaneseq
    %v956 = vshrl.u32 %v955, 7
    %v957 = vsub.s32 0, %v956
    %v958 = vrot.slane %v953, %v957
    %v960 = vadd.f32 %v958, 0.0
    %962 = vset.pattern.permute.xlu0 0
    %963 = vperm.xlu0 %962, %v949
    %v964 = vpop.permute.xlu0 %963
    %966 = vset.pattern.permute.xlu0 0
    %967 = vperm.xlu0 %966, %v941
    %v968 = vpop.permute.xlu0 %967
    %971 = vset.pattern.permute.xlu0 0
    %972 = vperm.xlu0 %971, %v950
    %v973 = vpop.permute.xlu0 %972
    %975 = vset.pattern.permute.xlu0 0
    %976 = vperm.xlu0 %975, %v944
    %v977 = vpop.permute.xlu0 %976
    %v979 = vld [vmem:[%s4] sm:$0x1]
    %v981 = vlaneseq
    %v982 = vshrl.u32 %v981, 7
    %v983 = vsub.s32 0, %v982
    %v984 = vrot.slane %v979, %v983
    %v986 = vmul.f32 %v964, %v984
    %v987 = vmul.f32 %v968, %v984
    %v988 = vmul.f32 %v973, %v984
    %v989 = vmul.f32 %v977, %v984
    %v990 = vadd.f32 %v960, %v986
    %v991 = vadd.f32 %v960, %v987
    %v992 = vadd.f32 %v960, %v988
    %v993 = vadd.f32 %v960, %v989
    %995 = vset.pattern.permute.xlu0 0
    %996 = vperm.xlu0 %995, %v951
    %v997 = vpop.permute.xlu0 %996
    %1000 = vset.pattern.permute.xlu0 0
    %1001 = vperm.xlu0 %1000, %v952
    %v1002 = vpop.permute.xlu0 %1001
    %s1004 = scalar_lea.vmem %s4, 1
    %v1005 = vld [vmem:[%s1004] sm:$0x1]
    %v1007 = vlaneseq
    %v1008 = vshrl.u32 %v1007, 7
    %v1009 = vsub.s32 0, %v1008
    %v1010 = vrot.slane %v1005, %v1009
    %v1012 = vmul.f32 %v964, %v1010
    %v1013 = vmul.f32 %v968, %v1010
    %v1014 = vmul.f32 %v997, %v1010
    %v1015 = vmul.f32 %v973, %v1010
    %v1016 = vmul.f32 %v977, %v1010
    %v1017 = vmul.f32 %v1002, %v1010
    %v1024 = vrot.slane %v1012, 1
    %v1025 = vrot.slane %v1013, 1
    %v1026 = vsel %vm176, %v1024, %v1025
    %v1027 = vrot.slane %v1014, 1
    %v1028 = vsel %vm176, %v1025, %v1027
    %v1029 = vrot.slane %v1015, 1
    %v1030 = vrot.slane %v1016, 1
    %v1031 = vsel %vm176, %v1029, %v1030
    %v1032 = vrot.slane %v1017, 1
    %v1033 = vsel %vm176, %v1030, %v1032
    %v1038 = vadd.f32 %v990, %v1026
    %v1039 = vadd.f32 %v991, %v1028
    %v1040 = vadd.f32 %v992, %v1031
    %v1041 = vadd.f32 %v993, %v1033
    %s1042 = scalar_lea.vmem %s4, 2
    %v1043 = vld [vmem:[%s1042] sm:$0x1]
    %v1045 = vlaneseq
    %v1046 = vshrl.u32 %v1045, 7
    %v1047 = vsub.s32 0, %v1046
    %v1048 = vrot.slane %v1043, %v1047
    %v1050 = vmul.f32 %v964, %v1048
    %v1051 = vmul.f32 %v968, %v1048
    %v1052 = vmul.f32 %v997, %v1048
    %v1053 = vmul.f32 %v973, %v1048
    %v1054 = vmul.f32 %v977, %v1048
    %v1055 = vmul.f32 %v1002, %v1048
    %v1062 = vrot.slane %v1050, 2
    %v1063 = vrot.slane %v1051, 2
    %v1064 = vsel %vm215, %v1062, %v1063
    %v1065 = vrot.slane %v1052, 2
    %v1066 = vsel %vm215, %v1063, %v1065
    %v1067 = vrot.slane %v1053, 2
    %v1068 = vrot.slane %v1054, 2
    %v1069 = vsel %vm215, %v1067, %v1068
    %v1070 = vrot.slane %v1055, 2
    %v1071 = vsel %vm215, %v1068, %v1070
    %v1076 = vadd.f32 %v1038, %v1064
    %v1077 = vadd.f32 %v1039, %v1066
    %v1078 = vadd.f32 %v1040, %v1069
    %v1079 = vadd.f32 %v1041, %v1071
    %s1080 = scalar_lea.vmem %s4, 3
    %v1081 = vld [vmem:[%s1080] sm:$0x1]
    %v1083 = vlaneseq
    %v1084 = vshrl.u32 %v1083, 7
    %v1085 = vsub.s32 0, %v1084
    %v1086 = vrot.slane %v1081, %v1085
    %v1088 = vmul.f32 %v964, %v1086
    %v1089 = vmul.f32 %v968, %v1086
    %v1090 = vmul.f32 %v997, %v1086
    %v1091 = vmul.f32 %v973, %v1086
    %v1092 = vmul.f32 %v977, %v1086
    %v1093 = vmul.f32 %v1002, %v1086
    %v1100 = vrot.slane %v1088, 3
    %v1101 = vrot.slane %v1089, 3
    %v1102 = vsel %vm254, %v1100, %v1101
    %v1103 = vrot.slane %v1090, 3
    %v1104 = vsel %vm254, %v1101, %v1103
    %v1105 = vrot.slane %v1091, 3
    %v1106 = vrot.slane %v1092, 3
    %v1107 = vsel %vm254, %v1105, %v1106
    %v1108 = vrot.slane %v1093, 3
    %v1109 = vsel %vm254, %v1106, %v1108
    %v1114 = vadd.f32 %v1076, %v1102
    %v1115 = vadd.f32 %v1077, %v1104
    %v1116 = vadd.f32 %v1078, %v1107
    %v1117 = vadd.f32 %v1079, %v1109
    %s1118 = scalar_lea.vmem %s4, 4
    %v1119 = vld [vmem:[%s1118] sm:$0x1]
    %v1121 = vlaneseq
    %v1122 = vshrl.u32 %v1121, 7
    %v1123 = vsub.s32 0, %v1122
    %v1124 = vrot.slane %v1119, %v1123
    %v1126 = vmul.f32 %v964, %v1124
    %v1127 = vmul.f32 %v968, %v1124
    %v1128 = vmul.f32 %v997, %v1124
    %v1129 = vmul.f32 %v973, %v1124
    %v1130 = vmul.f32 %v977, %v1124
    %v1131 = vmul.f32 %v1002, %v1124
    %v1138 = vrot.slane %v1126, 4
    %v1139 = vrot.slane %v1127, 4
    %v1140 = vsel %vm293, %v1138, %v1139
    %v1141 = vrot.slane %v1128, 4
    %v1142 = vsel %vm293, %v1139, %v1141
    %v1143 = vrot.slane %v1129, 4
    %v1144 = vrot.slane %v1130, 4
    %v1145 = vsel %vm293, %v1143, %v1144
    %v1146 = vrot.slane %v1131, 4
    %v1147 = vsel %vm293, %v1144, %v1146
    %v1152 = vadd.f32 %v1114, %v1140
    %v1153 = vadd.f32 %v1115, %v1142
    %v1154 = vadd.f32 %v1116, %v1145
    %v1155 = vadd.f32 %v1117, %v1147
    %vm1156 = vcmp.gt.f32.partialorder %v1152, 0.0
    %vm1157 = vcmp.gt.f32.partialorder %v1153, 0.0
    %vm1158 = vcmp.gt.f32.partialorder %v1154, 0.0
    %vm1159 = vcmp.gt.f32.partialorder %v1155, 0.0
    %v1160 = vmin.f32 %v1152, 0.0
    %v1161 = vmin.f32 %v1153, 0.0
    %v1162 = vmin.f32 %v1154, 0.0
    %v1163 = vmin.f32 %v1155, 0.0
    %v1164 = vmul.f32 %v1160, 1.442695
    %v1165 = vpow.pop %v1164
    %v1166 = vmul.f32 %v1161, 1.442695
    %v1167 = vpow.pop %v1166
    %v1168 = vmul.f32 %v1162, 1.442695
    %v1169 = vpow.pop %v1168
    %v1170 = vmul.f32 %v1163, 1.442695
    %v1171 = vpow.pop %v1170
    %v1172 = vsub.f32 %v1165, 1.0
    %v1173 = vsub.f32 %v1167, 1.0
    %v1174 = vsub.f32 %v1169, 1.0
    %v1175 = vsub.f32 %v1171, 1.0
    %v1176 = vsel %vm1156, %v1152, %v1172
    %v1177 = vsel %vm1157, %v1153, %v1173
    %v1178 = vsel %vm1158, %v1154, %v1174
    %v1179 = vsel %vm1159, %v1155, %v1175
    %v1184 = vrot.slane %v1176, 6
    %v1185 = vrot.slane %v1177, 6
    %v1186 = vsel %vm90, %v1184, %v1185
    %v1187 = vrot.slane %v1178, 6
    %v1188 = vrot.slane %v1179, 6
    %v1189 = vsel %vm90, %v1187, %v1188
    %v1194 = vsel %vm90, 0.0, %v1184
    %v1195 = vsel %vm90, 0.0, %v1187
    %v1196 = vsel %vm90, %v1185, 0.0
    %v1197 = vsel %vm90, %v1188, 0.0
    %v1198 = vld [vmem:[#allocation2] sm:$0xff]
    %v1199 = vld [vmem:[#allocation2 + $0x8] sm:$0xff]
    %v1200 = vld [vmem:[#allocation2 + $0x10] sm:$0xff]
    %v1201 = vld [vmem:[#allocation2 + $0x18] sm:$0xff]
    %v1202 = vld [vmem:[#allocation2 + $0x20] sm:$0xff]
    %v1203 = vld [vmem:[#allocation2 + $0x28] sm:$0xff]
    %v1204 = vld [vmem:[#allocation2 + $0x30] sm:$0xff]
    %v1205 = vld [vmem:[#allocation2 + $0x38] sm:$0xff]
    %v1210 = vrot.slane %v1194, 1
    %v1211 = vrot.slane %v1186, 1
    %v1212 = vsel %vm176, %v1210, %v1211
    %v1213 = vrot.slane %v1196, 1
    %v1214 = vsel %vm176, %v1211, %v1213
    %v1215 = vrot.slane %v1195, 1
    %v1216 = vrot.slane %v1189, 1
    %v1217 = vsel %vm176, %v1215, %v1216
    %v1218 = vrot.slane %v1197, 1
    %v1219 = vsel %vm176, %v1216, %v1218
    %s1220 = scalar_lea.vmem [#allocation2], 64
    %v1221 = vld [vmem:[%s1220] sm:$0xff]
    %v1222 = vld [vmem:[%s1220 + $0x8] sm:$0xff]
    %v1223 = vld [vmem:[%s1220 + $0x10] sm:$0xff]
    %v1224 = vld [vmem:[%s1220 + $0x18] sm:$0xff]
    %v1225 = vld [vmem:[%s1220 + $0x20] sm:$0xff]
    %v1226 = vld [vmem:[%s1220 + $0x28] sm:$0xff]
    %v1227 = vld [vmem:[%s1220 + $0x30] sm:$0xff]
    %v1228 = vld [vmem:[%s1220 + $0x38] sm:$0xff]
    %vm1229 = vcmask 523264
    %v1230 = vsel %vm1229, %v1212, 0
    %v1232 = vsel %vm1229, %v1214, 0
    %v1234 = vsel %vm1229, %v1217, 0
    %v1236 = vsel %vm1229, %v1219, 0
    %1238 = vmatprep.subr.mxu0 0.0
    %1239 = vmatpush1.msra.mxu0 %v1221
    %1240 = vmatprep.subr.mxu0 0.0
    %1241 = vmatpush1.msra.mxu0 %v1222
    %1242 = vmatprep.subr.mxu0 0.0
    %1243 = vmatpush1.msra.mxu0 %v1223
    %1244 = vmatprep.subr.mxu0 0.0
    %1245 = vmatpush1.msra.mxu0 %v1224
    %1246 = vmatprep.subr.mxu0 0.0
    %1247 = vmatpush1.msra.mxu0 %v1225
    %1248 = vmatprep.subr.mxu0 0.0
    %1249 = vmatpush1.msra.mxu0 %v1226
    %1250 = vmatprep.subr.mxu0 0.0
    %1251 = vmatpush1.msra.mxu0 %v1227
    %1252 = vmatprep.subr.mxu0 0.0
    %1253 = vmatpush1.msra.mxu0 %v1228
    %1254 = vmatprep.subr.mxu0 0.0
    %1255 = vmatpush1.msra.mxu0 0.0
    %1256 = vmatprep.subr.mxu0 0.0
    %1257 = vmatpush1.msra.mxu0 0.0
    %1258 = vmatprep.subr.mxu0 0.0
    %1259 = vmatpush1.msra.mxu0 0.0
    %1260 = vmatprep.subr.mxu0 0.0
    %1261 = vmatpush1.msra.mxu0 0.0
    %1262 = vmatprep.subr.mxu0 0.0
    %1263 = vmatpush1.msra.mxu0 0.0
    %1264 = vmatprep.subr.mxu0 0.0
    %1265 = vmatpush1.msra.mxu0 0.0
    %1266 = vmatprep.subr.mxu0 0.0
    %1267 = vmatpush1.msra.mxu0 0.0
    %1268 = vmatprep.subr.mxu0 0.0
    %1269 = vmatpush1.msra.mxu0 0.0
    %1270 = vmatprep.subr.mxu0 0.0
    %1271 = vmatpush1.msra.mxu0 0.0
    %1272 = vmatprep.subr.mxu0 0.0
    %1273 = vmatpush1.msra.mxu0 0.0
    %1274 = vmatprep.subr.mxu0 0.0
    %1275 = vmatpush1.msra.mxu0 0.0
    %1276 = vmatprep.subr.mxu0 0.0
    %1277 = vmatpush1.msra.mxu0 0.0
    %1278 = vmatprep.subr.mxu0 0.0
    %1279 = vmatpush1.msra.mxu0 0.0
    %1280 = vmatprep.subr.mxu0 0.0
    %1281 = vmatpush1.msra.mxu0 0.0
    %1282 = vmatprep.subr.mxu0 0.0
    %1283 = vmatpush1.msra.mxu0 0.0
    %1284 = vmatprep.subr.mxu0 0.0
    %1285 = vmatpush1.msra.mxu0 0.0
    %1286 = vmatprep.subr.mxu0 0.0
    %1287 = vmatpush1.msra.mxu0 0.0
    %1288 = vmatprep.subr.mxu0 0.0
    %1289 = vmatpush1.msra.mxu0 0.0
    %1290 = vmatprep.subr.mxu0 0.0
    %1291 = vmatpush1.msra.mxu0 0.0
    %1292 = vmatprep.subr.mxu0 0.0
    %1293 = vmatpush1.msra.mxu0 0.0
    %1294 = vmatprep.subr.mxu0 0.0
    %1295 = vmatpush1.msra.mxu0 0.0
    %1296 = vmatprep.subr.mxu0 0.0
    %1297 = vmatpush1.msra.mxu0 0.0
    %1298 = vmatprep.subr.mxu0 0.0
    %1299 = vmatpush1.msra.mxu0 0.0
    %1300 = vmatprep.subr.mxu0 0.0
    %1301 = vmatpush1.msra.mxu0 0.0
    %1302 = vmatprep.mubr.f32.mxu0 0.0
    %1303 = vmatmul.mubr.f32.gmra.mrb[0].mxu0 %v1230
    %v1304 = vpop.f32.mrb[0].mxu0
    %v1305 = vadd.f32 0.0, %v1304
    %v1306 = vpop.f32.mrb[0].mxu0
    %1307 = vmatprep.mubr.f32.mxu0 0.0
    %1308 = vmatmul.mubr.f32.gmra.mrb[0].mxu0 %v1232
    %v1309 = vpop.f32.mrb[0].mxu0
    %v1310 = vadd.f32 0.0, %v1309
    %v1311 = vpop.f32.mrb[0].mxu0
    %1312 = vmatprep.mubr.f32.mxu0 0.0
    %1313 = vmatmul.mubr.f32.gmra.mrb[0].mxu0 %v1234
    %v1314 = vpop.f32.mrb[0].mxu0
    %v1315 = vadd.f32 0.0, %v1314
    %v1316 = vpop.f32.mrb[0].mxu0
    %1317 = vmatprep.mubr.f32.mxu0 0.0
    %1318 = vmatmul.mubr.f32.gmra.mrb[0].mxu0 %v1236
    %v1319 = vpop.f32.mrb[0].mxu0
    %v1320 = vadd.f32 0.0, %v1319
    %v1321 = vpop.f32.mrb[0].mxu0
    %1322 = vdwg.mxu0
    %v1323 = vsel %vm1229, %v1194, 0
    %v1325 = vsel %vm1229, %v1186, 0
    %v1327 = vsel %vm1229, %v1195, 0
    %v1329 = vsel %vm1229, %v1189, 0
    %1331 = vmatprep.subr.mxu0 0.0
    %1332 = vmatpush1.msra.mxu0 %v1198
    %1333 = vmatprep.subr.mxu0 0.0
    %1334 = vmatpush1.msra.mxu0 %v1199
    %1335 = vmatprep.subr.mxu0 0.0
    %1336 = vmatpush1.msra.mxu0 %v1200
    %1337 = vmatprep.subr.mxu0 0.0
    %1338 = vmatpush1.msra.mxu0 %v1201
    %1339 = vmatprep.subr.mxu0 0.0
    %1340 = vmatpush1.msra.mxu0 %v1202
    %1341 = vmatprep.subr.mxu0 0.0
    %1342 = vmatpush1.msra.mxu0 %v1203
    %1343 = vmatprep.subr.mxu0 0.0
    %1344 = vmatpush1.msra.mxu0 %v1204
    %1345 = vmatprep.subr.mxu0 0.0
    %1346 = vmatpush1.msra.mxu0 %v1205
    %1347 = vmatprep.subr.mxu0 0.0
    %1348 = vmatpush1.msra.mxu0 0.0
    %1349 = vmatprep.subr.mxu0 0.0
    %1350 = vmatpush1.msra.mxu0 0.0
    %1351 = vmatprep.subr.mxu0 0.0
    %1352 = vmatpush1.msra.mxu0 0.0
    %1353 = vmatprep.subr.mxu0 0.0
    %1354 = vmatpush1.msra.mxu0 0.0
    %1355 = vmatprep.subr.mxu0 0.0
    %1356 = vmatpush1.msra.mxu0 0.0
    %1357 = vmatprep.subr.mxu0 0.0
    %1358 = vmatpush1.msra.mxu0 0.0
    %1359 = vmatprep.subr.mxu0 0.0
    %1360 = vmatpush1.msra.mxu0 0.0
    %1361 = vmatprep.subr.mxu0 0.0
    %1362 = vmatpush1.msra.mxu0 0.0
    %1363 = vmatprep.subr.mxu0 0.0
    %1364 = vmatpush1.msra.mxu0 0.0
    %1365 = vmatprep.subr.mxu0 0.0
    %1366 = vmatpush1.msra.mxu0 0.0
    %1367 = vmatprep.subr.mxu0 0.0
    %1368 = vmatpush1.msra.mxu0 0.0
    %1369 = vmatprep.subr.mxu0 0.0
    %1370 = vmatpush1.msra.mxu0 0.0
    %1371 = vmatprep.subr.mxu0 0.0
    %1372 = vmatpush1.msra.mxu0 0.0
    %1373 = vmatprep.subr.mxu0 0.0
    %1374 = vmatpush1.msra.mxu0 0.0
    %1375 = vmatprep.subr.mxu0 0.0
    %1376 = vmatpush1.msra.mxu0 0.0
    %1377 = vmatprep.subr.mxu0 0.0
    %1378 = vmatpush1.msra.mxu0 0.0
    %1379 = vmatprep.subr.mxu0 0.0
    %1380 = vmatpush1.msra.mxu0 0.0
    %1381 = vmatprep.subr.mxu0 0.0
    %1382 = vmatpush1.msra.mxu0 0.0
    %1383 = vmatprep.subr.mxu0 0.0
    %1384 = vmatpush1.msra.mxu0 0.0
    %1385 = vmatprep.subr.mxu0 0.0
    %1386 = vmatpush1.msra.mxu0 0.0
    %1387 = vmatprep.subr.mxu0 0.0
    %1388 = vmatpush1.msra.mxu0 0.0
    %1389 = vmatprep.subr.mxu0 0.0
    %1390 = vmatpush1.msra.mxu0 0.0
    %1391 = vmatprep.subr.mxu0 0.0
    %1392 = vmatpush1.msra.mxu0 0.0
    %1393 = vmatprep.subr.mxu0 0.0
    %1394 = vmatpush1.msra.mxu0 0.0
    %1395 = vmatprep.mubr.f32.mxu0 0.0
    %1396 = vmatmul.mubr.f32.gmra.mrb[0].mxu0 %v1323
    %v1397 = vpop.f32.mrb[0].mxu0
    %v1398 = vadd.f32 %v1305, %v1397
    %v1399 = vpop.f32.mrb[0].mxu0
    %1400 = vmatprep.mubr.f32.mxu0 0.0
    %1401 = vmatmul.mubr.f32.gmra.mrb[0].mxu0 %v1325
    %v1402 = vpop.f32.mrb[0].mxu0
    %v1403 = vadd.f32 %v1310, %v1402
    %v1404 = vpop.f32.mrb[0].mxu0
    %1405 = vmatprep.mubr.f32.mxu0 0.0
    %1406 = vmatmul.mubr.f32.gmra.mrb[0].mxu0 %v1327
    %v1407 = vpop.f32.mrb[0].mxu0
    %v1408 = vadd.f32 %v1315, %v1407
    %v1409 = vpop.f32.mrb[0].mxu0
    %1410 = vmatprep.mubr.f32.mxu0 0.0
    %1411 = vmatmul.mubr.f32.gmra.mrb[0].mxu0 %v1329
    %v1412 = vpop.f32.mrb[0].mxu0
    %v1413 = vadd.f32 %v1320, %v1412
    %v1414 = vpop.f32.mrb[0].mxu0
    %1415 = vdwg.mxu0
    %v1416 = vrot.slane %v1194, 2
    %v1417 = vrot.slane %v1186, 2
    %v1418 = vsel %vm215, %v1416, %v1417
    %v1419 = vrot.slane %v1196, 2
    %v1420 = vsel %vm215, %v1417, %v1419
    %v1421 = vrot.slane %v1195, 2
    %v1422 = vrot.slane %v1189, 2
    %v1423 = vsel %vm215, %v1421, %v1422
    %v1424 = vrot.slane %v1197, 2
    %v1425 = vsel %vm215, %v1422, %v1424
    %s1426 = scalar_lea.vmem [#allocation2], 128
    %v1427 = vld [vmem:[%s1426] sm:$0xff]
    %v1428 = vld [vmem:[%s1426 + $0x8] sm:$0xff]
    %v1429 = vld [vmem:[%s1426 + $0x10] sm:$0xff]
    %v1430 = vld [vmem:[%s1426 + $0x18] sm:$0xff]
    %v1431 = vld [vmem:[%s1426 + $0x20] sm:$0xff]
    %v1432 = vld [vmem:[%s1426 + $0x28] sm:$0xff]
    %v1433 = vld [vmem:[%s1426 + $0x30] sm:$0xff]
    %v1434 = vld [vmem:[%s1426 + $0x38] sm:$0xff]
    %v1435 = vsel %vm1229, %v1418, 0
    %v1437 = vsel %vm1229, %v1420, 0
    %v1439 = vsel %vm1229, %v1423, 0
    %v1441 = vsel %vm1229, %v1425, 0
    %1443 = vmatprep.subr.mxu0 0.0
    %1444 = vmatpush1.msra.mxu0 %v1427
    %1445 = vmatprep.subr.mxu0 0.0
    %1446 = vmatpush1.msra.mxu0 %v1428
    %1447 = vmatprep.subr.mxu0 0.0
    %1448 = vmatpush1.msra.mxu0 %v1429
    %1449 = vmatprep.subr.mxu0 0.0
    %1450 = vmatpush1.msra.mxu0 %v1430
    %1451 = vmatprep.subr.mxu0 0.0
    %1452 = vmatpush1.msra.mxu0 %v1431
    %1453 = vmatprep.subr.mxu0 0.0
    %1454 = vmatpush1.msra.mxu0 %v1432
    %1455 = vmatprep.subr.mxu0 0.0
    %1456 = vmatpush1.msra.mxu0 %v1433
    %1457 = vmatprep.subr.mxu0 0.0
    %1458 = vmatpush1.msra.mxu0 %v1434
    %1459 = vmatprep.subr.mxu0 0.0
    %1460 = vmatpush1.msra.mxu0 0.0
    %1461 = vmatprep.subr.mxu0 0.0
    %1462 = vmatpush1.msra.mxu0 0.0
    %1463 = vmatprep.subr.mxu0 0.0
    %1464 = vmatpush1.msra.mxu0 0.0
    %1465 = vmatprep.subr.mxu0 0.0
    %1466 = vmatpush1.msra.mxu0 0.0
    %1467 = vmatprep.subr.mxu0 0.0
    %1468 = vmatpush1.msra.mxu0 0.0
    %1469 = vmatprep.subr.mxu0 0.0
    %1470 = vmatpush1.msra.mxu0 0.0
    %1471 = vmatprep.subr.mxu0 0.0
    %1472 = vmatpush1.msra.mxu0 0.0
    %1473 = vmatprep.subr.mxu0 0.0
    %1474 = vmatpush1.msra.mxu0 0.0
    %1475 = vmatprep.subr.mxu0 0.0
    %1476 = vmatpush1.msra.mxu0 0.0
    %1477 = vmatprep.subr.mxu0 0.0
    %1478 = vmatpush1.msra.mxu0 0.0
    %1479 = vmatprep.subr.mxu0 0.0
    %1480 = vmatpush1.msra.mxu0 0.0
    %1481 = vmatprep.subr.mxu0 0.0
    %1482 = vmatpush1.msra.mxu0 0.0
    %1483 = vmatprep.subr.mxu0 0.0
    %1484 = vmatpush1.msra.mxu0 0.0
    %1485 = vmatprep.subr.mxu0 0.0
    %1486 = vmatpush1.msra.mxu0 0.0
    %1487 = vmatprep.subr.mxu0 0.0
    %1488 = vmatpush1.msra.mxu0 0.0
    %1489 = vmatprep.subr.mxu0 0.0
    %1490 = vmatpush1.msra.mxu0 0.0
    %1491 = vmatprep.subr.mxu0 0.0
    %1492 = vmatpush1.msra.mxu0 0.0
    %1493 = vmatprep.subr.mxu0 0.0
    %1494 = vmatpush1.msra.mxu0 0.0
    %1495 = vmatprep.subr.mxu0 0.0
    %1496 = vmatpush1.msra.mxu0 0.0
    %1497 = vmatprep.subr.mxu0 0.0
    %1498 = vmatpush1.msra.mxu0 0.0
    %1499 = vmatprep.subr.mxu0 0.0
    %1500 = vmatpush1.msra.mxu0 0.0
    %1501 = vmatprep.subr.mxu0 0.0
    %1502 = vmatpush1.msra.mxu0 0.0
    %1503 = vmatprep.subr.mxu0 0.0
    %1504 = vmatpush1.msra.mxu0 0.0
    %1505 = vmatprep.subr.mxu0 0.0
    %1506 = vmatpush1.msra.mxu0 0.0
    %1507 = vmatprep.mubr.f32.mxu0 0.0
    %1508 = vmatmul.mubr.f32.gmra.mrb[0].mxu0 %v1435
    %v1509 = vpop.f32.mrb[0].mxu0
    %v1510 = vadd.f32 0.0, %v1509
    %v1511 = vpop.f32.mrb[0].mxu0
    %1512 = vmatprep.mubr.f32.mxu0 0.0
    %1513 = vmatmul.mubr.f32.gmra.mrb[0].mxu0 %v1437
    %v1514 = vpop.f32.mrb[0].mxu0
    %v1515 = vadd.f32 0.0, %v1514
    %v1516 = vpop.f32.mrb[0].mxu0
    %1517 = vmatprep.mubr.f32.mxu0 0.0
    %1518 = vmatmul.mubr.f32.gmra.mrb[0].mxu0 %v1439
    %v1519 = vpop.f32.mrb[0].mxu0
    %v1520 = vadd.f32 0.0, %v1519
    %v1521 = vpop.f32.mrb[0].mxu0
    %1522 = vmatprep.mubr.f32.mxu0 0.0
    %1523 = vmatmul.mubr.f32.gmra.mrb[0].mxu0 %v1441
    %v1524 = vpop.f32.mrb[0].mxu0
    %v1525 = vadd.f32 0.0, %v1524
    %v1526 = vpop.f32.mrb[0].mxu0
    %1527 = vdwg.mxu0
    %v1528 = vadd.f32 %v1398, %v1510
    %v1529 = vadd.f32 %v1403, %v1515
    %v1530 = vadd.f32 %v1408, %v1520
    %v1531 = vadd.f32 %v1413, %v1525
    %v1532 = vrot.slane %v1194, 3
    %v1533 = vrot.slane %v1186, 3
    %v1534 = vsel %vm254, %v1532, %v1533
    %v1535 = vrot.slane %v1196, 3
    %v1536 = vsel %vm254, %v1533, %v1535
    %v1537 = vrot.slane %v1195, 3
    %v1538 = vrot.slane %v1189, 3
    %v1539 = vsel %vm254, %v1537, %v1538
    %v1540 = vrot.slane %v1197, 3
    %v1541 = vsel %vm254, %v1538, %v1540
    %s1542 = scalar_lea.vmem [#allocation2], 192
    %v1543 = vld [vmem:[%s1542] sm:$0xff]
    %v1544 = vld [vmem:[%s1542 + $0x8] sm:$0xff]
    %v1545 = vld [vmem:[%s1542 + $0x10] sm:$0xff]
    %v1546 = vld [vmem:[%s1542 + $0x18] sm:$0xff]
    %v1547 = vld [vmem:[%s1542 + $0x20] sm:$0xff]
    %v1548 = vld [vmem:[%s1542 + $0x28] sm:$0xff]
    %v1549 = vld [vmem:[%s1542 + $0x30] sm:$0xff]
    %v1550 = vld [vmem:[%s1542 + $0x38] sm:$0xff]
    %v1551 = vsel %vm1229, %v1534, 0
    %v1553 = vsel %vm1229, %v1536, 0
    %v1555 = vsel %vm1229, %v1539, 0
    %v1557 = vsel %vm1229, %v1541, 0
    %1559 = vmatprep.subr.mxu0 0.0
    %1560 = vmatpush1.msra.mxu0 %v1543
    %1561 = vmatprep.subr.mxu0 0.0
    %1562 = vmatpush1.msra.mxu0 %v1544
    %1563 = vmatprep.subr.mxu0 0.0
    %1564 = vmatpush1.msra.mxu0 %v1545
    %1565 = vmatprep.subr.mxu0 0.0
    %1566 = vmatpush1.msra.mxu0 %v1546
    %1567 = vmatprep.subr.mxu0 0.0
    %1568 = vmatpush1.msra.mxu0 %v1547
    %1569 = vmatprep.subr.mxu0 0.0
    %1570 = vmatpush1.msra.mxu0 %v1548
    %1571 = vmatprep.subr.mxu0 0.0
    %1572 = vmatpush1.msra.mxu0 %v1549
    %1573 = vmatprep.subr.mxu0 0.0
    %1574 = vmatpush1.msra.mxu0 %v1550
    %1575 = vmatprep.subr.mxu0 0.0
    %1576 = vmatpush1.msra.mxu0 0.0
    %1577 = vmatprep.subr.mxu0 0.0
    %1578 = vmatpush1.msra.mxu0 0.0
    %1579 = vmatprep.subr.mxu0 0.0
    %1580 = vmatpush1.msra.mxu0 0.0
    %1581 = vmatprep.subr.mxu0 0.0
    %1582 = vmatpush1.msra.mxu0 0.0
    %1583 = vmatprep.subr.mxu0 0.0
    %1584 = vmatpush1.msra.mxu0 0.0
    %1585 = vmatprep.subr.mxu0 0.0
    %1586 = vmatpush1.msra.mxu0 0.0
    %1587 = vmatprep.subr.mxu0 0.0
    %1588 = vmatpush1.msra.mxu0 0.0
    %1589 = vmatprep.subr.mxu0 0.0
    %1590 = vmatpush1.msra.mxu0 0.0
    %1591 = vmatprep.subr.mxu0 0.0
    %1592 = vmatpush1.msra.mxu0 0.0
    %1593 = vmatprep.subr.mxu0 0.0
    %1594 = vmatpush1.msra.mxu0 0.0
    %1595 = vmatprep.subr.mxu0 0.0
    %1596 = vmatpush1.msra.mxu0 0.0
    %1597 = vmatprep.subr.mxu0 0.0
    %1598 = vmatpush1.msra.mxu0 0.0
    %1599 = vmatprep.subr.mxu0 0.0
    %1600 = vmatpush1.msra.mxu0 0.0
    %1601 = vmatprep.subr.mxu0 0.0
    %1602 = vmatpush1.msra.mxu0 0.0
    %1603 = vmatprep.subr.mxu0 0.0
    %1604 = vmatpush1.msra.mxu0 0.0
    %1605 = vmatprep.subr.mxu0 0.0
    %1606 = vmatpush1.msra.mxu0 0.0
    %1607 = vmatprep.subr.mxu0 0.0
    %1608 = vmatpush1.msra.mxu0 0.0
    %1609 = vmatprep.subr.mxu0 0.0
    %1610 = vmatpush1.msra.mxu0 0.0
    %1611 = vmatprep.subr.mxu0 0.0
    %1612 = vmatpush1.msra.mxu0 0.0
    %1613 = vmatprep.subr.mxu0 0.0
    %1614 = vmatpush1.msra.mxu0 0.0
    %1615 = vmatprep.subr.mxu0 0.0
    %1616 = vmatpush1.msra.mxu0 0.0
    %1617 = vmatprep.subr.mxu0 0.0
    %1618 = vmatpush1.msra.mxu0 0.0
    %1619 = vmatprep.subr.mxu0 0.0
    %1620 = vmatpush1.msra.mxu0 0.0
    %1621 = vmatprep.subr.mxu0 0.0
    %1622 = vmatpush1.msra.mxu0 0.0
    %1623 = vmatprep.mubr.f32.mxu0 0.0
    %1624 = vmatmul.mubr.f32.gmra.mrb[0].mxu0 %v1551
    %v1625 = vpop.f32.mrb[0].mxu0
    %v1626 = vadd.f32 0.0, %v1625
    %v1627 = vpop.f32.mrb[0].mxu0
    %1628 = vmatprep.mubr.f32.mxu0 0.0
    %1629 = vmatmul.mubr.f32.gmra.mrb[0].mxu0 %v1553
    %v1630 = vpop.f32.mrb[0].mxu0
    %v1631 = vadd.f32 0.0, %v1630
    %v1632 = vpop.f32.mrb[0].mxu0
    %1633 = vmatprep.mubr.f32.mxu0 0.0
    %1634 = vmatmul.mubr.f32.gmra.mrb[0].mxu0 %v1555
    %v1635 = vpop.f32.mrb[0].mxu0
    %v1636 = vadd.f32 0.0, %v1635
    %v1637 = vpop.f32.mrb[0].mxu0
    %1638 = vmatprep.mubr.f32.mxu0 0.0
    %1639 = vmatmul.mubr.f32.gmra.mrb[0].mxu0 %v1557
    %v1640 = vpop.f32.mrb[0].mxu0
    %v1641 = vadd.f32 0.0, %v1640
    %v1642 = vpop.f32.mrb[0].mxu0
    %1643 = vdwg.mxu0
    %v1644 = vadd.f32 %v1528, %v1626
    %v1645 = vadd.f32 %v1529, %v1631
    %v1646 = vadd.f32 %v1530, %v1636
    %v1647 = vadd.f32 %v1531, %v1641
    %v1648 = vrot.slane %v1194, 4
    %v1649 = vrot.slane %v1186, 4
    %v1650 = vsel %vm293, %v1648, %v1649
    %v1651 = vrot.slane %v1196, 4
    %v1652 = vsel %vm293, %v1649, %v1651
    %v1653 = vrot.slane %v1195, 4
    %v1654 = vrot.slane %v1189, 4
    %v1655 = vsel %vm293, %v1653, %v1654
    %v1656 = vrot.slane %v1197, 4
    %v1657 = vsel %vm293, %v1654, %v1656
    %s1658 = scalar_lea.vmem [#allocation2], 256
    %v1659 = vld [vmem:[%s1658] sm:$0xff]
    %v1660 = vld [vmem:[%s1658 + $0x8] sm:$0xff]
    %v1661 = vld [vmem:[%s1658 + $0x10] sm:$0xff]
    %v1662 = vld [vmem:[%s1658 + $0x18] sm:$0xff]
    %v1663 = vld [vmem:[%s1658 + $0x20] sm:$0xff]
    %v1664 = vld [vmem:[%s1658 + $0x28] sm:$0xff]
    %v1665 = vld [vmem:[%s1658 + $0x30] sm:$0xff]
    %v1666 = vld [vmem:[%s1658 + $0x38] sm:$0xff]
    %v1667 = vsel %vm1229, %v1650, 0
    %v1669 = vsel %vm1229, %v1652, 0
    %v1671 = vsel %vm1229, %v1655, 0
    %v1673 = vsel %vm1229, %v1657, 0
    %1675 = vmatprep.subr.mxu0 0.0
    %1676 = vmatpush1.msra.mxu0 %v1659
    %1677 = vmatprep.subr.mxu0 0.0
    %1678 = vmatpush1.msra.mxu0 %v1660
    %1679 = vmatprep.subr.mxu0 0.0
    %1680 = vmatpush1.msra.mxu0 %v1661
    %1681 = vmatprep.subr.mxu0 0.0
    %1682 = vmatpush1.msra.mxu0 %v1662
    %1683 = vmatprep.subr.mxu0 0.0
    %1684 = vmatpush1.msra.mxu0 %v1663
    %1685 = vmatprep.subr.mxu0 0.0
    %1686 = vmatpush1.msra.mxu0 %v1664
    %1687 = vmatprep.subr.mxu0 0.0
    %1688 = vmatpush1.msra.mxu0 %v1665
    %1689 = vmatprep.subr.mxu0 0.0
    %1690 = vmatpush1.msra.mxu0 %v1666
    %1691 = vmatprep.subr.mxu0 0.0
    %1692 = vmatpush1.msra.mxu0 0.0
    %1693 = vmatprep.subr.mxu0 0.0
    %1694 = vmatpush1.msra.mxu0 0.0
    %1695 = vmatprep.subr.mxu0 0.0
    %1696 = vmatpush1.msra.mxu0 0.0
    %1697 = vmatprep.subr.mxu0 0.0
    %1698 = vmatpush1.msra.mxu0 0.0
    %1699 = vmatprep.subr.mxu0 0.0
    %1700 = vmatpush1.msra.mxu0 0.0
    %1701 = vmatprep.subr.mxu0 0.0
    %1702 = vmatpush1.msra.mxu0 0.0
    %1703 = vmatprep.subr.mxu0 0.0
    %1704 = vmatpush1.msra.mxu0 0.0
    %1705 = vmatprep.subr.mxu0 0.0
    %1706 = vmatpush1.msra.mxu0 0.0
    %1707 = vmatprep.subr.mxu0 0.0
    %1708 = vmatpush1.msra.mxu0 0.0
    %1709 = vmatprep.subr.mxu0 0.0
    %1710 = vmatpush1.msra.mxu0 0.0
    %1711 = vmatprep.subr.mxu0 0.0
    %1712 = vmatpush1.msra.mxu0 0.0
    %1713 = vmatprep.subr.mxu0 0.0
    %1714 = vmatpush1.msra.mxu0 0.0
    %1715 = vmatprep.subr.mxu0 0.0
    %1716 = vmatpush1.msra.mxu0 0.0
    %1717 = vmatprep.subr.mxu0 0.0
    %1718 = vmatpush1.msra.mxu0 0.0
    %1719 = vmatprep.subr.mxu0 0.0
    %1720 = vmatpush1.msra.mxu0 0.0
    %1721 = vmatprep.subr.mxu0 0.0
    %1722 = vmatpush1.msra.mxu0 0.0
    %1723 = vmatprep.subr.mxu0 0.0
    %1724 = vmatpush1.msra.mxu0 0.0
    %1725 = vmatprep.subr.mxu0 0.0
    %1726 = vmatpush1.msra.mxu0 0.0
    %1727 = vmatprep.subr.mxu0 0.0
    %1728 = vmatpush1.msra.mxu0 0.0
    %1729 = vmatprep.subr.mxu0 0.0
    %1730 = vmatpush1.msra.mxu0 0.0
    %1731 = vmatprep.subr.mxu0 0.0
    %1732 = vmatpush1.msra.mxu0 0.0
    %1733 = vmatprep.subr.mxu0 0.0
    %1734 = vmatpush1.msra.mxu0 0.0
    %1735 = vmatprep.subr.mxu0 0.0
    %1736 = vmatpush1.msra.mxu0 0.0
    %1737 = vmatprep.subr.mxu0 0.0
    %1738 = vmatpush1.msra.mxu0 0.0
    %1739 = vmatprep.mubr.f32.mxu0 0.0
    %1740 = vmatmul.mubr.f32.gmra.mrb[0].mxu0 %v1667
    %v1741 = vpop.f32.mrb[0].mxu0
    %v1742 = vadd.f32 0.0, %v1741
    %v1743 = vpop.f32.mrb[0].mxu0
    %1744 = vmatprep.mubr.f32.mxu0 0.0
    %1745 = vmatmul.mubr.f32.gmra.mrb[0].mxu0 %v1669
    %v1746 = vpop.f32.mrb[0].mxu0
    %v1747 = vadd.f32 0.0, %v1746
    %v1748 = vpop.f32.mrb[0].mxu0
    %1749 = vmatprep.mubr.f32.mxu0 0.0
    %1750 = vmatmul.mubr.f32.gmra.mrb[0].mxu0 %v1671
    %v1751 = vpop.f32.mrb[0].mxu0
    %v1752 = vadd.f32 0.0, %v1751
    %v1753 = vpop.f32.mrb[0].mxu0
    %1754 = vmatprep.mubr.f32.mxu0 0.0
    %1755 = vmatmul.mubr.f32.gmra.mrb[0].mxu0 %v1673
    %v1756 = vpop.f32.mrb[0].mxu0
    %v1757 = vadd.f32 0.0, %v1756
    %v1758 = vpop.f32.mrb[0].mxu0
    %1759 = vdwg.mxu0
    %v1760 = vadd.f32 %v1644, %v1742
    %v1761 = vadd.f32 %v1645, %v1747
    %v1762 = vadd.f32 %v1646, %v1752
    %v1763 = vadd.f32 %v1647, %v1757
    %v1764 = vld [vmem:[%s9] sm:$0x1]
    %v1766 = vlaneseq
    %v1767 = vshrl.u32 %v1766, 7
    %v1768 = vsub.s32 0, %v1767
    %v1769 = vrot.slane %v1764, %v1768
    %v1771 = vadd.f32 %v1760, %v1769
    %v1772 = vadd.f32 %v1761, %v1769
    %v1773 = vadd.f32 %v1762, %v1769
    %v1774 = vadd.f32 %v1763, %v1769
    %vm1775 = vcmp.gt.f32.partialorder %v1771, 0.0
    %vm1776 = vcmp.gt.f32.partialorder %v1772, 0.0
    %vm1777 = vcmp.gt.f32.partialorder %v1773, 0.0
    %vm1778 = vcmp.gt.f32.partialorder %v1774, 0.0
    %v1779 = vmin.f32 %v1771, 0.0
    %v1780 = vmin.f32 %v1772, 0.0
    %v1781 = vmin.f32 %v1773, 0.0
    %v1782 = vmin.f32 %v1774, 0.0
    %v1783 = vmul.f32 %v1779, 1.442695
    %v1784 = vpow.pop %v1783
    %v1785 = vmul.f32 %v1780, 1.442695
    %v1786 = vpow.pop %v1785
    %v1787 = vmul.f32 %v1781, 1.442695
    %v1788 = vpow.pop %v1787
    %v1789 = vmul.f32 %v1782, 1.442695
    %v1790 = vpow.pop %v1789
    %v1791 = vsub.f32 %v1784, 1.0
    %v1792 = vsub.f32 %v1786, 1.0
    %v1793 = vsub.f32 %v1788, 1.0
    %v1794 = vsub.f32 %v1790, 1.0
    %v1795 = vsel %vm1775, %v1771, %v1791
    %v1796 = vsel %vm1776, %v1772, %v1792
    %v1797 = vsel %vm1777, %v1773, %v1793
    %v1798 = vsel %vm1778, %v1774, %v1794
    %v1799 = vld [vmem:[%s10] sm:$0xff]
    %v1800 = vld [vmem:[%s10 + $0x8] sm:$0xff]
    %v1801 = vld [vmem:[%s10 + $0x10] sm:$0xff]
    %v1802 = vld [vmem:[%s10 + $0x18] sm:$0xff]
    %v1803 = vld [vmem:[%s11] sm:$0xff]
    %v1804 = vld [vmem:[%s11 + $0x8] sm:$0xff]
    %v1805 = vld [vmem:[%s11 + $0x10] sm:$0xff]
    %v1806 = vld [vmem:[%s11 + $0x18] sm:$0xff]
    %v1807 = vld [vmem:[%s11 + $0x20] sm:$0xff]
    %v1808 = vld [vmem:[%s11 + $0x28] sm:$0xff]
    %v1809 = vld [vmem:[%s11 + $0x30] sm:$0xff]
    %v1810 = vld [vmem:[%s11 + $0x38] sm:$0xff]
    %v1812 = vsel %vm1229, %v1795, 0
    %v1815 = vsel %vm1229, %v1796, 0
    %v1818 = vsel %vm1229, %v1797, 0
    %v1821 = vsel %vm1229, %v1798, 0
    %1823 = vmatprep.subr.mxu0 0.0
    %1824 = vmatpush1.msra.mxu0 %v1803
    %1825 = vmatprep.subr.mxu0 0.0
    %1826 = vmatpush1.msra.mxu0 %v1804
    %1827 = vmatprep.subr.mxu0 0.0
    %1828 = vmatpush1.msra.mxu0 %v1805
    %1829 = vmatprep.subr.mxu0 0.0
    %1830 = vmatpush1.msra.mxu0 %v1806
    %1831 = vmatprep.subr.mxu0 0.0
    %1832 = vmatpush1.msra.mxu0 %v1807
    %1833 = vmatprep.subr.mxu0 0.0
    %1834 = vmatpush1.msra.mxu0 %v1808
    %1835 = vmatprep.subr.mxu0 0.0
    %1836 = vmatpush1.msra.mxu0 %v1809
    %1837 = vmatprep.subr.mxu0 0.0
    %1838 = vmatpush1.msra.mxu0 %v1810
    %1839 = vmatprep.subr.mxu0 0.0
    %1840 = vmatpush1.msra.mxu0 0.0
    %1841 = vmatprep.subr.mxu0 0.0
    %1842 = vmatpush1.msra.mxu0 0.0
    %1843 = vmatprep.subr.mxu0 0.0
    %1844 = vmatpush1.msra.mxu0 0.0
    %1845 = vmatprep.subr.mxu0 0.0
    %1846 = vmatpush1.msra.mxu0 0.0
    %1847 = vmatprep.subr.mxu0 0.0
    %1848 = vmatpush1.msra.mxu0 0.0
    %1849 = vmatprep.subr.mxu0 0.0
    %1850 = vmatpush1.msra.mxu0 0.0
    %1851 = vmatprep.subr.mxu0 0.0
    %1852 = vmatpush1.msra.mxu0 0.0
    %1853 = vmatprep.subr.mxu0 0.0
    %1854 = vmatpush1.msra.mxu0 0.0
    %1855 = vmatprep.subr.mxu0 0.0
    %1856 = vmatpush1.msra.mxu0 0.0
    %1857 = vmatprep.subr.mxu0 0.0
    %1858 = vmatpush1.msra.mxu0 0.0
    %1859 = vmatprep.subr.mxu0 0.0
    %1860 = vmatpush1.msra.mxu0 0.0
    %1861 = vmatprep.subr.mxu0 0.0
    %1862 = vmatpush1.msra.mxu0 0.0
    %1863 = vmatprep.subr.mxu0 0.0
    %1864 = vmatpush1.msra.mxu0 0.0
    %1865 = vmatprep.subr.mxu0 0.0
    %1866 = vmatpush1.msra.mxu0 0.0
    %1867 = vmatprep.subr.mxu0 0.0
    %1868 = vmatpush1.msra.mxu0 0.0
    %1869 = vmatprep.subr.mxu0 0.0
    %1870 = vmatpush1.msra.mxu0 0.0
    %1871 = vmatprep.subr.mxu0 0.0
    %1872 = vmatpush1.msra.mxu0 0.0
    %1873 = vmatprep.subr.mxu0 0.0
    %1874 = vmatpush1.msra.mxu0 0.0
    %1875 = vmatprep.subr.mxu0 0.0
    %1876 = vmatpush1.msra.mxu0 0.0
    %1877 = vmatprep.subr.mxu0 0.0
    %1878 = vmatpush1.msra.mxu0 0.0
    %1879 = vmatprep.subr.mxu0 0.0
    %1880 = vmatpush1.msra.mxu0 0.0
    %1881 = vmatprep.subr.mxu0 0.0
    %1882 = vmatpush1.msra.mxu0 0.0
    %1883 = vmatprep.subr.mxu0 0.0
    %1884 = vmatpush1.msra.mxu0 0.0
    %1885 = vmatprep.subr.mxu0 0.0
    %1886 = vmatpush1.msra.mxu0 0.0
    %1887 = vmatprep.mubr.f32.mxu0 0.0
    %1888 = vmatmul.mubr.f32.gmra.mrb[0].mxu0 %v1812
    %v1889 = vpop.f32.mrb[0].mxu0
    %v1890 = vadd.f32 0.0, %v1889
    %v1891 = vpop.f32.mrb[0].mxu0
    %1892 = vmatprep.mubr.f32.mxu0 0.0
    %1893 = vmatmul.mubr.f32.gmra.mrb[0].mxu0 %v1815
    %v1894 = vpop.f32.mrb[0].mxu0
    %v1895 = vadd.f32 0.0, %v1894
    %v1896 = vpop.f32.mrb[0].mxu0
    %1897 = vmatprep.mubr.f32.mxu0 0.0
    %1898 = vmatmul.mubr.f32.gmra.mrb[0].mxu0 %v1818
    %v1899 = vpop.f32.mrb[0].mxu0
    %v1900 = vadd.f32 0.0, %v1899
    %v1901 = vpop.f32.mrb[0].mxu0
    %1902 = vmatprep.mubr.f32.mxu0 0.0
    %1903 = vmatmul.mubr.f32.gmra.mrb[0].mxu0 %v1821
    %v1904 = vpop.f32.mrb[0].mxu0
    %v1905 = vadd.f32 0.0, %v1904
    %v1906 = vpop.f32.mrb[0].mxu0
    %1907 = vdwg.mxu0
    %v1909 = vsel %vm377, %v931, 0
    %v1912 = vsel %vm377, %v932, 0
    %v1915 = vsel %vm377, %v933, 0
    %v1918 = vsel %vm377, %v934, 0
    %1920 = vmatprep.subr.mxu0 0.0
    %1921 = vmatpush1.msra.mxu0 %v1799
    %1922 = vmatprep.subr.mxu0 0.0
    %1923 = vmatpush1.msra.mxu0 %v1800
    %1924 = vmatprep.subr.mxu0 0.0
    %1925 = vmatpush1.msra.mxu0 %v1801
    %1926 = vmatprep.subr.mxu0 0.0
    %1927 = vmatpush1.msra.mxu0 %v1802
    %1928 = vmatprep.subr.mxu0 0.0
    %1929 = vmatpush1.msra.mxu0 0.0
    %1930 = vmatprep.subr.mxu0 0.0
    %1931 = vmatpush1.msra.mxu0 0.0
    %1932 = vmatprep.subr.mxu0 0.0
    %1933 = vmatpush1.msra.mxu0 0.0
    %1934 = vmatprep.subr.mxu0 0.0
    %1935 = vmatpush1.msra.mxu0 0.0
    %1936 = vmatprep.subr.mxu0 0.0
    %1937 = vmatpush1.msra.mxu0 0.0
    %1938 = vmatprep.subr.mxu0 0.0
    %1939 = vmatpush1.msra.mxu0 0.0
    %1940 = vmatprep.subr.mxu0 0.0
    %1941 = vmatpush1.msra.mxu0 0.0
    %1942 = vmatprep.subr.mxu0 0.0
    %1943 = vmatpush1.msra.mxu0 0.0
    %1944 = vmatprep.subr.mxu0 0.0
    %1945 = vmatpush1.msra.mxu0 0.0
    %1946 = vmatprep.subr.mxu0 0.0
    %1947 = vmatpush1.msra.mxu0 0.0
    %1948 = vmatprep.subr.mxu0 0.0
    %1949 = vmatpush1.msra.mxu0 0.0
    %1950 = vmatprep.subr.mxu0 0.0
    %1951 = vmatpush1.msra.mxu0 0.0
    %1952 = vmatprep.subr.mxu0 0.0
    %1953 = vmatpush1.msra.mxu0 0.0
    %1954 = vmatprep.subr.mxu0 0.0
    %1955 = vmatpush1.msra.mxu0 0.0
    %1956 = vmatprep.subr.mxu0 0.0
    %1957 = vmatpush1.msra.mxu0 0.0
    %1958 = vmatprep.subr.mxu0 0.0
    %1959 = vmatpush1.msra.mxu0 0.0
    %1960 = vmatprep.subr.mxu0 0.0
    %1961 = vmatpush1.msra.mxu0 0.0
    %1962 = vmatprep.subr.mxu0 0.0
    %1963 = vmatpush1.msra.mxu0 0.0
    %1964 = vmatprep.subr.mxu0 0.0
    %1965 = vmatpush1.msra.mxu0 0.0
    %1966 = vmatprep.subr.mxu0 0.0
    %1967 = vmatpush1.msra.mxu0 0.0
    %1968 = vmatprep.subr.mxu0 0.0
    %1969 = vmatpush1.msra.mxu0 0.0
    %1970 = vmatprep.subr.mxu0 0.0
    %1971 = vmatpush1.msra.mxu0 0.0
    %1972 = vmatprep.subr.mxu0 0.0
    %1973 = vmatpush1.msra.mxu0 0.0
    %1974 = vmatprep.subr.mxu0 0.0
    %1975 = vmatpush1.msra.mxu0 0.0
    %1976 = vmatprep.subr.mxu0 0.0
    %1977 = vmatpush1.msra.mxu0 0.0
    %1978 = vmatprep.subr.mxu0 0.0
    %1979 = vmatpush1.msra.mxu0 0.0
    %1980 = vmatprep.subr.mxu0 0.0
    %1981 = vmatpush1.msra.mxu0 0.0
    %1982 = vmatprep.subr.mxu0 0.0
    %1983 = vmatpush1.msra.mxu0 0.0
    %1984 = vmatprep.mubr.f32.mxu0 0.0
    %1985 = vmatmul.mubr.f32.gmra.mrb[0].mxu0 %v1909
    %v1986 = vpop.f32.mrb[0].mxu0
    %v1987 = vadd.f32 %v1890, %v1986
    %v1988 = vpop.f32.mrb[0].mxu0
    %1989 = vmatprep.mubr.f32.mxu0 0.0
    %1990 = vmatmul.mubr.f32.gmra.mrb[0].mxu0 %v1912
    %v1991 = vpop.f32.mrb[0].mxu0
    %v1992 = vadd.f32 %v1895, %v1991
    %v1993 = vpop.f32.mrb[0].mxu0
    %1994 = vmatprep.mubr.f32.mxu0 0.0
    %1995 = vmatmul.mubr.f32.gmra.mrb[0].mxu0 %v1915
    %v1996 = vpop.f32.mrb[0].mxu0
    %v1997 = vadd.f32 %v1900, %v1996
    %v1998 = vpop.f32.mrb[0].mxu0
    %1999 = vmatprep.mubr.f32.mxu0 0.0
    %2000 = vmatmul.mubr.f32.gmra.mrb[0].mxu0 %v1918
    %v2001 = vpop.f32.mrb[0].mxu0
    %v2002 = vadd.f32 %v1905, %v2001
    %v2003 = vpop.f32.mrb[0].mxu0
    %2004 = vdwg.mxu0
    %v2005 = vld [vmem:[%s12] sm:$0x1]
    %v2007 = vlaneseq
    %v2008 = vshrl.u32 %v2007, 7
    %v2009 = vsub.s32 0, %v2008
    %v2010 = vrot.slane %v2005, %v2009
    %v2012 = vadd.f32 %v1987, %v2010
    %v2013 = vadd.f32 %v1992, %v2010
    %v2014 = vadd.f32 %v1997, %v2010
    %v2015 = vadd.f32 %v2002, %v2010
    %vm2016 = vcmp.gt.f32.partialorder %v2012, 0.0
    %vm2017 = vcmp.gt.f32.partialorder %v2013, 0.0
    %vm2018 = vcmp.gt.f32.partialorder %v2014, 0.0
    %vm2019 = vcmp.gt.f32.partialorder %v2015, 0.0
    %v2020 = vmin.f32 %v2012, 0.0
    %v2021 = vmin.f32 %v2013, 0.0
    %v2022 = vmin.f32 %v2014, 0.0
    %v2023 = vmin.f32 %v2015, 0.0
    %v2024 = vmul.f32 %v2020, 1.442695
    %v2025 = vpow.pop %v2024
    %v2026 = vmul.f32 %v2021, 1.442695
    %v2027 = vpow.pop %v2026
    %v2028 = vmul.f32 %v2022, 1.442695
    %v2029 = vpow.pop %v2028
    %v2030 = vmul.f32 %v2023, 1.442695
    %v2031 = vpow.pop %v2030
    %v2032 = vsub.f32 %v2025, 1.0
    %v2033 = vsub.f32 %v2027, 1.0
    %v2034 = vsub.f32 %v2029, 1.0
    %v2035 = vsub.f32 %v2031, 1.0
    %v2036 = vsel %vm2016, %v2012, %v2032
    %v2037 = vsel %vm2017, %v2013, %v2033
    %v2038 = vsel %vm2018, %v2014, %v2034
    %v2039 = vsel %vm2019, %v2015, %v2035
    %2040 = vxpose.xlu0.b32.start [1/16] %v2036, 128
    %2041 = vxpose.xlu0.b32.cont [2/16] %v2037, 128
    %2042 = vxpose.xlu0.b32.cont [3/16] %v2038, 128
    %2043 = vxpose.xlu0.b32.cont [4/16] %v2039, 128
    %2044 = vxpose.xlu0.b32.cont [5/16] 0.0, 128
    %2045 = vxpose.xlu0.b32.cont [6/16] 0.0, 128
    %2046 = vxpose.xlu0.b32.cont [7/16] 0.0, 128
    %2047 = vxpose.xlu0.b32.cont [8/16] 0.0, 128
    %2048 = vxpose.xlu0.b32.cont [9/16] 0.0, 128
    %2049 = vxpose.xlu0.b32.cont [10/16] 0.0, 128
    %2050 = vxpose.xlu0.b32.cont [11/16] 0.0, 128
    %2051 = vxpose.xlu0.b32.cont [12/16] 0.0, 128
    %2052 = vxpose.xlu0.b32.cont [13/16] 0.0, 128
    %2053 = vxpose.xlu0.b32.cont [14/16] 0.0, 128
    %2054 = vxpose.xlu0.b32.cont [15/16] 0.0, 128
    %2055 = vxpose.xlu0.b32.end [16/16] 0.0, 128
    %v2056 = vpop.trf.xlu0
    %v2057 = vpop.trf.xlu0
    %v2058 = vpop.trf.xlu0
    %v2059 = vpop.trf.xlu0
    %v2060 = vpop.trf.xlu0
    %v2061 = vpop.trf.xlu0
    %v2062 = vpop.trf.xlu0
    %v2063 = vpop.trf.xlu0
    %v2064 = vpop.trf.xlu0
    %v2065 = vpop.trf.xlu0
    %v2066 = vpop.trf.xlu0
    %v2067 = vpop.trf.xlu0
    %v2068 = vpop.trf.xlu0
    %v2069 = vpop.trf.xlu0
    %v2070 = vpop.trf.xlu0
    %v2071 = vpop.trf.xlu0
    %vm2072 = vcmask 256000
    %2073 = vst.msk [vmem:[#allocation5] sm:$0x7] %vm2072, %v2056
    %vm2074 = vcmask 23552
    %v2075 = vsel %vm2074, %v2036, 0.0
    %v2076 = vsel %vm2074, %v2037, 0.0
    %v2077 = vadd.f32 %v2075, %v2076
    %v2078 = vsel %vm2074, %v2038, 0.0
    %v2079 = vadd.f32 %v2077, %v2078
    %v2080 = vsel %vm2074, %v2039, 0.0
    %v2081 = vadd.f32 %v2079, %v2080
    %2082 = vadd.xlane.f32.xlu0 %v2081
    %v2083 = vpop.xlane.xlu0 %2082
    %v2084 = vrot.slane %v2083, 4
    %v2085 = vadd.f32 %v2083, %v2084
    %v2086 = vrot.slane %v2085, 2
    %v2087 = vadd.f32 %v2085, %v2086
    %v2088 = vrot.slane %v2087, 1
    %v2089 = vadd.f32 %v2087, %v2088
    %s2090 = vtos %v2089
    %v2091 = vmul.f32 %v2036, %v2036
    %v2092 = vmul.f32 %v2037, %v2037
    %v2093 = vmul.f32 %v2038, %v2038
    %v2094 = vmul.f32 %v2039, %v2039
    %v2095 = vsel %vm2074, %v2091, 0.0
    %v2096 = vsel %vm2074, %v2092, 0.0
    %v2097 = vadd.f32 %v2095, %v2096
    %v2098 = vsel %vm2074, %v2093, 0.0
    %v2099 = vadd.f32 %v2097, %v2098
    %v2100 = vsel %vm2074, %v2094, 0.0
    %v2101 = vadd.f32 %v2099, %v2100
    %2102 = vadd.xlane.f32.xlu0 %v2101
    %v2103 = vpop.xlane.xlu0 %2102
    %v2104 = vrot.slane %v2103, 4
    %v2105 = vadd.f32 %v2103, %v2104
    %v2106 = vrot.slane %v2105, 2
    %v2107 = vadd.f32 %v2105, %v2106
    %v2108 = vrot.slane %v2107, 1
    %v2109 = vadd.f32 %v2107, %v2108
    %s2110 = vtos %v2109
    %v2111 = vlaneseq
    %v2112 = vshrl.u32 %v2111, 7
    %v2113 = vlaneseq
    %v2114 = vand.u32 %v2113, 127
    %vm2115 = vcmp.eq.s32.totalorder %v2112, 0
    %vm2116 = vcmp.eq.s32.totalorder %v2114, 0
    %vm2117 = vmand %vm2115, %vm2116
    %v2118 = vstv %s2090
    %v2119 = vsel %vm2117, %v2118, 0.0
    %vm2120 = vcmp.eq.s32.totalorder %v2114, 1
    %vm2121 = vmand %vm2115, %vm2120
    %v2122 = vstv %s2110
    %v2123 = vsel %vm2121, %v2122, %v2119
    %2124 = vst [vmem:[#allocation6] sm:$0xff] %v2123
    // Predicated region
    $region58: #{tpu_custom_call.1} parent=1 // pred_check
      _
    $region59: #{tpu_custom_call.1} parent=1 // pred_check_branch
      %2126 = sbr.rel (0) target = $region61
    $region60: #{tpu_custom_call.1} parent=1 // pred_region
      %s2128 = ssub.s32 64, 64
      %2129 = vsyncadd [#allocation4], %s2128
      %s2131 = sshll.u32 [#allocation5], 4
      %s2132 = int_to_ptr.vmem [resolvable:$true] %s2131
      %2134 = dma.vmem_to_hbm [thread:$0]  %s2132, 64, %s13, [#allocation4]
    $region61: #{tpu_custom_call.1} parent=1 // pred_fallthru
      _
    // Predicated region
    $region62: #{tpu_custom_call.1} parent=1 // pred_check
      _
    $region63: #{tpu_custom_call.1} parent=1 // pred_check_branch
      %2136 = sbr.rel (0) target = $region65
    $region64: #{tpu_custom_call.1} parent=1 // pred_region
      %s2138 = ssub.s32 128, 128
      %2139 = vsyncadd [#allocation7], %s2138
      %s2141 = sshll.u32 [#allocation6], 4
      %s2142 = int_to_ptr.vmem [resolvable:$true] %s2141
      %2144 = dma.vmem_to_hbm [thread:$0]  %s2142, 128, %s14, [#allocation7]
    $region65: #{tpu_custom_call.1} parent=1 // pred_fallthru
      _
    // Predicated region
    $region66: #{tpu_custom_call.1} parent=1 // pred_check
      _
    $region67: #{tpu_custom_call.1} parent=1 // pred_check_branch
      %2146 = sbr.rel (0) target = $region69
    $region68: #{tpu_custom_call.1} parent=1 // pred_region
      %2147 = dma.done [#allocation4], 64
    $region69: #{tpu_custom_call.1} parent=1 // pred_fallthru
      _
    // Predicated region
    $region70: #{tpu_custom_call.1} parent=1 // pred_check
      _
    $region71: #{tpu_custom_call.1} parent=1 // pred_check_branch
      %2149 = sbr.rel (0) target = $region73
    $region72: #{tpu_custom_call.1} parent=1 // pred_region
      %2150 = dma.done [#allocation7], 128
    $region73: #{tpu_custom_call.1} parent=1 // pred_fallthru
      _
    %2151 = vsyncpa [#allocation3], 1
    %2152 = vsyncpa [#allocation4], 1
    %2153 = vsyncpa [#allocation7], 1

</llo_original>
